<compile_context>
chip_gen: v6e
topology: v6e:2x2x1
jax: 0.10.0
libtpu: 0.0.40
codegen_flags: <defaults>
</compile_context>

<pallas_src>
import functools
import math

import jax
import jax.numpy as jnp
from jax.experimental import pallas as pl
from jax.experimental.pallas import tpu as pltpu


# ----------------------------- configuration ---------------------------------

class Config:
    vocab_size = 128
    hidden = 32
    heads = 2
    head_dim = 16            # hidden // heads
    layers = 2
    intermediate = 64
    max_pos = 64
    type_vocab = 2
    ln_eps = 1e-12


PARAM_DTYPE = jnp.bfloat16   # MXU-native operand storage
ACT_DTYPE = jnp.bfloat16     # kernel output dtype


# ------------------------------ math helpers ----------------------------------

def _gelu_f32(x):
    # TODO(synk): HF BERT default is erf-GELU; tanh approximation used (EUP path).
    c = math.sqrt(2.0 / math.pi)
    return 0.5 * x * (1.0 + jnp.tanh(c * (x + 0.044715 * x * x * x)))


def _layernorm_f32(x, gamma, beta, eps):
    mean = jnp.mean(x, axis=-1, keepdims=True)
    var = jnp.mean(jnp.square(x - mean), axis=-1, keepdims=True)
    return (x - mean) * jax.lax.rsqrt(var + eps) * gamma + beta


# ------------------------------- Pallas kernel ---------------------------------

def _encoder_kernel(we_ref, pe_ref, te_ref, eg_ref, eb_ref, mask_ref,
                    wqkv_ref, bqkv_ref, wo_ref, bo_ref, ln1g_ref, ln1b_ref,
                    w1_ref, b1_ref, w2_ref, b2_ref, ln2g_ref, ln2b_ref,
                    o_ref, x_ref,
                    *, S, nH, dh, eps, n_layers):
    """One grid step = (one batch row-block, one transformer layer).

    grid = (B, L): b is 'parallel', l is 'arbitrary'. x_ref (VMEM scratch,
    f32 (S,H)) carries the activation across the layer axis.
    """
    H = nH * dh
    l = pl.program_id(1)
    scale = 1.0 / math.sqrt(dh)

    # ---- fused embedding sum + LayerNorm (only on the first layer step) ------
    @pl.when(l == 0)
    def _():
        emb = (we_ref[...].astype(jnp.float32)
               + pe_ref[...].astype(jnp.float32)
               + te_ref[...].astype(jnp.float32))                     # (S, H)
        x_ref[...] = _layernorm_f32(emb, eg_ref[...].astype(jnp.float32),
                                    eb_ref[...].astype(jnp.float32), eps)

    x = x_ref[...]                                                    # (S, H) f32
    xb = x.astype(jnp.bfloat16)

    # ---- attention block: fused QKV -> batched MHA -> single out-proj --------
    qkv = (jnp.dot(xb, wqkv_ref[...], preferred_element_type=jnp.float32)
           + bqkv_ref[...].astype(jnp.float32))                       # (S, 3H) f32

    # (nH, S, dh) views: heads become the batch dim of one dot_general each.
    q3 = jnp.stack([qkv[:, h * dh:(h + 1) * dh] for h in range(nH)], axis=0)
    k3 = jnp.stack([qkv[:, H + h * dh:H + (h + 1) * dh] for h in range(nH)], axis=0)
    v3 = jnp.stack([qkv[:, 2 * H + h * dh:2 * H + (h + 1) * dh] for h in range(nH)],
                   axis=0)

    s = jnp.einsum('hqd,hkd->hqk', q3, k3,
                   preferred_element_type=jnp.float32)                # (nH, S, S)
    s = s * scale + mask_ref[...].astype(jnp.float32)                 # (1,1,S) bias
    s = s - jnp.max(s, axis=-1, keepdims=True)
    p = jnp.exp(s)
    p = p * pl.reciprocal(jnp.sum(p, axis=-1, keepdims=True), approx=True)
    ctx = jnp.einsum('hqk,hkd->hqd', p, v3,
                     preferred_element_type=jnp.float32)              # (nH, S, dh)

    # lane-wise head merge (matches Wo's row layout), then ONE K=H projection.
    ctx_m = jnp.concatenate([ctx[h] for h in range(nH)], axis=-1)     # (S, H)
    attn = (jnp.dot(ctx_m.astype(jnp.bfloat16), wo_ref[...],
                    preferred_element_type=jnp.float32)
            + bo_ref[...].astype(jnp.float32))                        # (S, H)
    x1 = _layernorm_f32(attn + x, ln1g_ref[...].astype(jnp.float32),
                        ln1b_ref[...].astype(jnp.float32), eps)

    # ---- FFN block: W1 -> GELU -> W2 -> +residual -> LN -----------------------
    h = (jnp.dot(x1.astype(jnp.bfloat16), w1_ref[...],
                 preferred_element_type=jnp.float32)
         + b1_ref[...].astype(jnp.float32))                           # (S, I)
    h = _gelu_f32(h)
    y = (jnp.dot(h.astype(jnp.bfloat16), w2_ref[...],
                 preferred_element_type=jnp.float32)
         + b2_ref[...].astype(jnp.float32))                           # (S, H)
    x2 = _layernorm_f32(y + x1, ln2g_ref[...].astype(jnp.float32),
                        ln2b_ref[...].astype(jnp.float32), eps)

    x_ref[...] = x2                      # single full-block VMEM store (resident)

    @pl.when(l == n_layers - 1)
    def _():
        o_ref[...] = x2.astype(o_ref.dtype)   # one lane-dense output write per batch


# ------------------------------ kernel wrapper ---------------------------------

def pallas_bert_encoder(we, pe, te, mask_bias, params, cfg, B, S):
    H, I, L = cfg.hidden, cfg.intermediate, cfg.layers
    nH, dh = cfg.heads, cfg.head_dim

    kernel = functools.partial(_encoder_kernel, S=S, nH=nH, dh=dh,
                               eps=cfg.ln_eps, n_layers=L)

    const3 = lambda b, l: (0, 0, 0)     # broadcast over grid
    by_b3 = lambda b, l: (b, 0, 0)      # per-batch row block
    by_l3 = lambda b, l: (l, 0, 0)      # per-layer weight block (streamed)

    grid_spec = pltpu.PrefetchScalarGridSpec(
        num_scalar_prefetch=0,
        grid=(B, L),
        in_specs=[
            pl.BlockSpec((None, S, H), by_b3),                       # word emb
            pl.BlockSpec((None, S, H), const3),                      # pos emb
            pl.BlockSpec((None, S, H), by_b3),                       # type emb
            pl.BlockSpec((1, H), lambda b, l: (0, 0)),               # emb LN gamma
            pl.BlockSpec((1, H), lambda b, l: (0, 0)),               # emb LN beta
            pl.BlockSpec((None, 1, 1, S), lambda b, l: (b, 0, 0, 0)),  # mask bias
            pl.BlockSpec((None, H, 3 * H), by_l3),                   # wqkv
            pl.BlockSpec((None, 1, 3 * H), by_l3),                   # bqkv
            pl.BlockSpec((None, H, H), by_l3),                       # wo
            pl.BlockSpec((None, 1, H), by_l3),                       # bo
            pl.BlockSpec((None, 1, H), by_l3),                       # ln1 gamma
            pl.BlockSpec((None, 1, H), by_l3),                       # ln1 beta
            pl.BlockSpec((None, H, I), by_l3),                       # w1
            pl.BlockSpec((None, 1, I), by_l3),                       # b1
            pl.BlockSpec((None, I, H), by_l3),                       # w2
            pl.BlockSpec((None, 1, H), by_l3),                       # b2
            pl.BlockSpec((None, 1, H), by_l3),                       # ln2 gamma
            pl.BlockSpec((None, 1, H), by_l3),                       # ln2 beta
        ],
        out_specs=pl.BlockSpec((None, S, H), by_b3),
        scratch_shapes=[pltpu.VMEM((S, H), jnp.float32)],            # resident x
    )

    return pl.pallas_call(
        kernel,
        grid_spec=grid_spec,
        out_shape=jax.ShapeDtypeStruct((B, S, H), ACT_DTYPE),
        compiler_params=pltpu.CompilerParams(
            dimension_semantics=("parallel", "arbitrary"),
            vmem_limit_bytes=32 * 1024 * 1024,
        ),
    )(we, pe, te, params["emb_ln_g"], params["emb_ln_b"], mask_bias,
      params["wqkv"], params["bqkv"], params["wo"], params["bo"],
      params["ln1_g"], params["ln1_b"], params["w1"], params["b1"],
      params["w2"], params["b2"], params["ln2_g"], params["ln2_b"])


# -------------------------------- parameters -----------------------------------

def init_params(key, cfg):
    keys = iter(jax.random.split(key, 32))

    def nrm(shape):
        return (0.02 * jax.random.normal(next(keys), shape, jnp.float32)
                ).astype(PARAM_DTYPE)

    def ones(shape):
        return jnp.ones(shape, PARAM_DTYPE)

    def zeros(shape):
        return jnp.zeros(shape, PARAM_DTYPE)

    H, I, L = cfg.hidden, cfg.intermediate, cfg.layers
    # Per-layer weights stacked with a leading `layers` axis so one gridded
    # pallas_call can stream them layer-by-layer via BlockSpec index_maps.
    return {
        "word_emb": nrm((cfg.vocab_size, H)),
        "pos_emb": nrm((cfg.max_pos, H)),
        "type_emb": nrm((cfg.type_vocab, H)),
        "emb_ln_g": ones((1, H)),
        "emb_ln_b": zeros((1, H)),
        "wqkv": nrm((L, H, 3 * H)),      # fused Q|K|V projection
        "bqkv": zeros((L, 1, 3 * H)),
        "wo": nrm((L, H, H)),
        "bo": zeros((L, 1, H)),
        "ln1_g": ones((L, 1, H)),
        "ln1_b": zeros((L, 1, H)),
        "w1": nrm((L, H, I)),
        "b1": zeros((L, 1, I)),
        "w2": nrm((L, I, H)),
        "b2": zeros((L, 1, H)),
        "ln2_g": ones((L, 1, H)),
        "ln2_b": zeros((L, 1, H)),
    }


# ------------------------------- forward pass -----------------------------------

def simcse_forward(params, input_ids, attention_mask, token_type_ids, cfg):
    """BertModel forward; returns last_hidden_state[:, 0] (pooling='cls')."""
    B, S = input_ids.shape

    # Embedding-table gathers stay in XLA (tiny glue at toy dims).
    # TODO(synk): move into the kernel via scalar-prefetched ids + pl.Element maps.
    we = params["word_emb"][input_ids]                  # (B, S, H)
    pe = params["pos_emb"][:S][None, :, :]              # (1, S, H)
    te = params["type_emb"][token_type_ids]             # (B, S, H)

    # HF-BERT extended attention mask: additive bias over keys, (B, 1, 1, S).
    mask_bias = ((1.0 - attention_mask.astype(jnp.float32)) * -10000.0
                 ).reshape(B, 1, 1, S)

    last_hidden = pallas_bert_encoder(we, pe, te, mask_bias, params, cfg, B, S)
    return last_hidden[:, 0]                            # CLS pooling


# ----------------------------------- main ----------------------------------------

if __name__ == "__main__":
    cfg = Config()
    key = jax.random.PRNGKey(0)
    k_param, k_ids = jax.random.split(key)

    params = init_params(k_param, cfg)

    B, S = 2, 8
    input_ids = jax.random.randint(k_ids, (B, S), 0, cfg.vocab_size, dtype=jnp.int32)
    attention_mask = jnp.array(
        [[1, 1, 1, 1, 1, 1, 1, 1],
         [1, 1, 1, 1, 1, 0, 0, 0]], dtype=jnp.int32)
    token_type_ids = jnp.zeros((B, S), dtype=jnp.int32)

    cls_vec = simcse_forward(params, input_ids, attention_mask, token_type_ids, cfg)
    jax.block_until_ready(cls_vec)
    assert cls_vec.shape == (B, cfg.hidden)
    assert bool(jnp.all(jnp.isfinite(cls_vec.astype(jnp.float32))))
    print("KERNEL_OK")
</pallas_src>

<mosaic_0001>
module attributes {stable_mosaic.version = 11 : i64} {
  func.func @_encoder_kernel(%arg0: i32, %arg1: i32, %arg2: memref<1x8x32xbf16, #tpu.memory_space<vmem>>, %arg3: memref<1x8x32xbf16, #tpu.memory_space<vmem>>, %arg4: memref<1x8x32xbf16, #tpu.memory_space<vmem>>, %arg5: memref<1x32xbf16, #tpu.memory_space<vmem>>, %arg6: memref<1x32xbf16, #tpu.memory_space<vmem>>, %arg7: memref<1x1x1x8xf32, #tpu.memory_space<vmem>>, %arg8: memref<1x32x96xbf16, #tpu.memory_space<vmem>>, %arg9: memref<1x1x96xbf16, #tpu.memory_space<vmem>>, %arg10: memref<1x32x32xbf16, #tpu.memory_space<vmem>>, %arg11: memref<1x1x32xbf16, #tpu.memory_space<vmem>>, %arg12: memref<1x1x32xbf16, #tpu.memory_space<vmem>>, %arg13: memref<1x1x32xbf16, #tpu.memory_space<vmem>>, %arg14: memref<1x32x64xbf16, #tpu.memory_space<vmem>>, %arg15: memref<1x1x64xbf16, #tpu.memory_space<vmem>>, %arg16: memref<1x64x32xbf16, #tpu.memory_space<vmem>>, %arg17: memref<1x1x32xbf16, #tpu.memory_space<vmem>>, %arg18: memref<1x1x32xbf16, #tpu.memory_space<vmem>>, %arg19: memref<1x1x32xbf16, #tpu.memory_space<vmem>>, %arg20: memref<1x8x32xbf16, #tpu.memory_space<vmem>>, %arg21: memref<8x32xf32, #tpu.memory_space<vmem>>) attributes {dimension_semantics = [#tpu.dimension_semantics<parallel>, #tpu.dimension_semantics<arbitrary>], iteration_bounds = array<i64: 2, 2>, scalar_prefetch = 0 : i64, scratch_operands = 1 : i64, tpu.core_type = #tpu.core_type<tc>, window_params = [{transform_indices = @transform_0, window_bounds = array<i64: 1, 8, 32>}, {pipeline_mode = #tpu.pipeline_mode<synchronous>, transform_indices = @transform_1, window_bounds = array<i64: 1, 8, 32>}, {transform_indices = @transform_2, window_bounds = array<i64: 1, 8, 32>}, {pipeline_mode = #tpu.pipeline_mode<synchronous>, transform_indices = @transform_3, window_bounds = array<i64: 1, 32>}, {pipeline_mode = #tpu.pipeline_mode<synchronous>, transform_indices = @transform_4, window_bounds = array<i64: 1, 32>}, {transform_indices = @transform_5, window_bounds = array<i64: 1, 1, 1, 8>}, {transform_indices = @transform_6, window_bounds = array<i64: 1, 32, 96>}, {transform_indices = @transform_7, window_bounds = array<i64: 1, 1, 96>}, {transform_indices = @transform_8, window_bounds = array<i64: 1, 32, 32>}, {transform_indices = @transform_9, window_bounds = array<i64: 1, 1, 32>}, {transform_indices = @transform_10, window_bounds = array<i64: 1, 1, 32>}, {transform_indices = @transform_11, window_bounds = array<i64: 1, 1, 32>}, {transform_indices = @transform_12, window_bounds = array<i64: 1, 32, 64>}, {transform_indices = @transform_13, window_bounds = array<i64: 1, 1, 64>}, {transform_indices = @transform_14, window_bounds = array<i64: 1, 64, 32>}, {transform_indices = @transform_15, window_bounds = array<i64: 1, 1, 32>}, {transform_indices = @transform_16, window_bounds = array<i64: 1, 1, 32>}, {transform_indices = @transform_17, window_bounds = array<i64: 1, 1, 32>}, {transform_indices = @transform_18, window_bounds = array<i64: 1, 8, 32>}]} {
    %c0_i32 = arith.constant 0 : i32
    %0 = arith.cmpi eq, %arg1, %c0_i32 : i32
    %1 = arith.extui %0 : i1 to i32
    %c0_i32_0 = arith.constant 0 : i32
    %2 = arith.cmpi ne, %1, %c0_i32_0 : i32
    scf.if %2 {
      %c0_67 = arith.constant 0 : index
      %c0_68 = arith.constant 0 : index
      %c0_69 = arith.constant 0 : index
      %153 = vector.load %arg2[%c0_67, %c0_68, %c0_69] : memref<1x8x32xbf16, #tpu.memory_space<vmem>>, vector<1x8x32xbf16>
      %154 = vector.shape_cast %153 : vector<1x8x32xbf16> to vector<8x32xbf16>
      %155 = arith.extf %154 : vector<8x32xbf16> to vector<8x32xf32>
      %c0_70 = arith.constant 0 : index
      %c0_71 = arith.constant 0 : index
      %c0_72 = arith.constant 0 : index
      %156 = vector.load %arg3[%c0_70, %c0_71, %c0_72] : memref<1x8x32xbf16, #tpu.memory_space<vmem>>, vector<1x8x32xbf16>
      %157 = vector.shape_cast %156 : vector<1x8x32xbf16> to vector<8x32xbf16>
      %158 = arith.extf %157 : vector<8x32xbf16> to vector<8x32xf32>
      %159 = arith.addf %155, %158 : vector<8x32xf32>
      %c0_73 = arith.constant 0 : index
      %c0_74 = arith.constant 0 : index
      %c0_75 = arith.constant 0 : index
      %160 = vector.load %arg4[%c0_73, %c0_74, %c0_75] : memref<1x8x32xbf16, #tpu.memory_space<vmem>>, vector<1x8x32xbf16>
      %161 = vector.shape_cast %160 : vector<1x8x32xbf16> to vector<8x32xbf16>
      %162 = arith.extf %161 : vector<8x32xbf16> to vector<8x32xf32>
      %163 = arith.addf %159, %162 : vector<8x32xf32>
      %c0_76 = arith.constant 0 : index
      %c0_77 = arith.constant 0 : index
      %164 = vector.load %arg5[%c0_76, %c0_77] : memref<1x32xbf16, #tpu.memory_space<vmem>>, vector<1x32xbf16>
      %165 = arith.extf %164 : vector<1x32xbf16> to vector<1x32xf32>
      %c0_78 = arith.constant 0 : index
      %c0_79 = arith.constant 0 : index
      %166 = vector.load %arg6[%c0_78, %c0_79] : memref<1x32xbf16, #tpu.memory_space<vmem>>, vector<1x32xbf16>
      %167 = arith.extf %166 : vector<1x32xbf16> to vector<1x32xf32>
      %cst_80 = arith.constant dense<0.000000e+00> : vector<8xf32>
      %168 = vector.multi_reduction <add>, %163, %cst_80 [1] : vector<8x32xf32> to vector<8xf32>
      %169 = vector.shape_cast %168 : vector<8xf32> to vector<8x1xf32>
      %cst_81 = arith.constant 3.200000e+01 : f32
      %170 = vector.broadcast %cst_81 : f32 to vector<8x1xf32>
      %171 = arith.divf %169, %170 : vector<8x1xf32>
      %172 = vector.broadcast %171 : vector<8x1xf32> to vector<8x32xf32>
      %173 = arith.subf %163, %172 : vector<8x32xf32>
      %174 = arith.mulf %173, %173 : vector<8x32xf32>
      %cst_82 = arith.constant dense<0.000000e+00> : vector<8xf32>
      %175 = vector.multi_reduction <add>, %174, %cst_82 [1] : vector<8x32xf32> to vector<8xf32>
      %176 = vector.shape_cast %175 : vector<8xf32> to vector<8x1xf32>
      %cst_83 = arith.constant 3.200000e+01 : f32
      %177 = vector.broadcast %cst_83 : f32 to vector<8x1xf32>
      %178 = arith.divf %176, %177 : vector<8x1xf32>
      %179 = vector.broadcast %171 : vector<8x1xf32> to vector<8x32xf32>
      %180 = arith.subf %163, %179 : vector<8x32xf32>
      %cst_84 = arith.constant 9.99999996E-13 : f32
      %181 = vector.broadcast %cst_84 : f32 to vector<8x1xf32>
      %182 = arith.addf %178, %181 : vector<8x1xf32>
      %183 = math.rsqrt %182 : vector<8x1xf32>
      %184 = vector.broadcast %183 : vector<8x1xf32> to vector<8x32xf32>
      %185 = arith.mulf %180, %184 : vector<8x32xf32>
      %186 = vector.broadcast %165 : vector<1x32xf32> to vector<8x32xf32>
      %187 = arith.mulf %185, %186 : vector<8x32xf32>
      %188 = vector.broadcast %167 : vector<1x32xf32> to vector<8x32xf32>
      %189 = arith.addf %187, %188 : vector<8x32xf32>
      %c0_85 = arith.constant 0 : index
      %c0_86 = arith.constant 0 : index
      %190 = vector.load %arg21[%c0_85, %c0_86] : memref<8x32xf32, #tpu.memory_space<vmem>>, vector<8x32xf32>
      tpu.vector_store %arg21[%c0_85, %c0_86], %189 {strides = array<i32>} : memref<8x32xf32, #tpu.memory_space<vmem>>, vector<8x32xf32>,
    } else {
    }
    %c0 = arith.constant 0 : index
    %c0_1 = arith.constant 0 : index
    %3 = vector.load %arg21[%c0, %c0_1] : memref<8x32xf32, #tpu.memory_space<vmem>>, vector<8x32xf32>
    %4 = arith.truncf %3 : vector<8x32xf32> to vector<8x32xbf16>
    %c0_2 = arith.constant 0 : index
    %c0_3 = arith.constant 0 : index
    %c0_4 = arith.constant 0 : index
    %5 = vector.load %arg8[%c0_2, %c0_3, %c0_4] : memref<1x32x96xbf16, #tpu.memory_space<vmem>>, vector<1x32x96xbf16>
    %6 = vector.shape_cast %5 : vector<1x32x96xbf16> to vector<32x96xbf16>
    %cst = arith.constant dense<0.000000e+00> : vector<8x96xf32>
    %7 = tpu.matmul %4, %6, %cst {dimension_numbers = #tpu.dot_dimension_numbers<[1], [0], [0], [1], [0, 0, 1, 1], [], []>} : vector<8x32xbf16>, vector<32x96xbf16>, vector<8x96xf32> -> vector<8x96xf32>
    %c0_5 = arith.constant 0 : index
    %c0_6 = arith.constant 0 : index
    %c0_7 = arith.constant 0 : index
    %8 = vector.load %arg9[%c0_5, %c0_6, %c0_7] : memref<1x1x96xbf16, #tpu.memory_space<vmem>>, vector<1x1x96xbf16>
    %9 = vector.shape_cast %8 : vector<1x1x96xbf16> to vector<1x96xbf16>
    %10 = arith.extf %9 : vector<1x96xbf16> to vector<1x96xf32>
    %11 = vector.broadcast %10 : vector<1x96xf32> to vector<8x96xf32>
    %12 = arith.addf %7, %11 : vector<8x96xf32>
    %13 = vector.extract_strided_slice %12 {offsets = [0, 0], sizes = [8, 16], strides = [1, 1]} : vector<8x96xf32> to vector<8x16xf32>
    %14 = vector.extract_strided_slice %12 {offsets = [0, 16], sizes = [8, 16], strides = [1, 1]} : vector<8x96xf32> to vector<8x16xf32>
    %15 = vector.shape_cast %13 : vector<8x16xf32> to vector<1x8x16xf32>
    %16 = vector.shape_cast %14 : vector<8x16xf32> to vector<1x8x16xf32>
    %17 = tpu.concatenate %15, %16 in 0 : vector<1x8x16xf32>, vector<1x8x16xf32> -> vector<2x8x16xf32>
    %18 = vector.extract_strided_slice %12 {offsets = [0, 32], sizes = [8, 16], strides = [1, 1]} : vector<8x96xf32> to vector<8x16xf32>
    %19 = vector.extract_strided_slice %12 {offsets = [0, 48], sizes = [8, 16], strides = [1, 1]} : vector<8x96xf32> to vector<8x16xf32>
    %20 = vector.shape_cast %18 : vector<8x16xf32> to vector<1x8x16xf32>
    %21 = vector.shape_cast %19 : vector<8x16xf32> to vector<1x8x16xf32>
    %22 = tpu.concatenate %20, %21 in 0 : vector<1x8x16xf32>, vector<1x8x16xf32> -> vector<2x8x16xf32>
    %23 = vector.extract_strided_slice %12 {offsets = [0, 64], sizes = [8, 16], strides = [1, 1]} : vector<8x96xf32> to vector<8x16xf32>
    %24 = vector.extract_strided_slice %12 {offsets = [0, 80], sizes = [8, 16], strides = [1, 1]} : vector<8x96xf32> to vector<8x16xf32>
    %25 = vector.shape_cast %23 : vector<8x16xf32> to vector<1x8x16xf32>
    %26 = vector.shape_cast %24 : vector<8x16xf32> to vector<1x8x16xf32>
    %27 = tpu.concatenate %25, %26 in 0 : vector<1x8x16xf32>, vector<1x8x16xf32> -> vector<2x8x16xf32>
    "tpu.trace_start"() <{level = 10 : i32, message = "hqd,hkd->hqk"}> : () -> ()
    %cst_8 = arith.constant dense<0.000000e+00> : vector<2x8x8xf32>
    %28 = tpu.matmul %17, %22, %cst_8 {dimension_numbers = #tpu.dot_dimension_numbers<[2], [2], [1], [1], [0, 0, 0, 1, 1, 1], [0], [0]>} : vector<2x8x16xf32>, vector<2x8x16xf32>, vector<2x8x8xf32> -> vector<2x8x8xf32>
    "tpu.trace_stop"() : () -> ()
    %cst_9 = arith.constant 2.500000e-01 : f32
    %29 = vector.broadcast %cst_9 : f32 to vector<2x8x8xf32>
    %30 = arith.mulf %28, %29 : vector<2x8x8xf32>
    %c0_10 = arith.constant 0 : index
    %c0_11 = arith.constant 0 : index
    %c0_12 = arith.constant 0 : index
    %c0_13 = arith.constant 0 : index
    %31 = vector.load %arg7[%c0_10, %c0_11, %c0_12, %c0_13] : memref<1x1x1x8xf32, #tpu.memory_space<vmem>>, vector<1x1x1x8xf32>
    %32 = vector.shape_cast %31 : vector<1x1x1x8xf32> to vector<1x1x8xf32>
    %33 = vector.broadcast %32 : vector<1x1x8xf32> to vector<2x8x8xf32>
    %34 = arith.addf %30, %33 : vector<2x8x8xf32>
    %cst_14 = arith.constant dense<0xFF800000> : vector<2x8xf32>
    %35 = vector.multi_reduction <maximumf>, %34, %cst_14 [2] : vector<2x8x8xf32> to vector<2x8xf32>
    %36 = vector.shape_cast %35 : vector<2x8xf32> to vector<2x8x1xf32>
    %37 = vector.broadcast %36 : vector<2x8x1xf32> to vector<2x8x8xf32>
    %38 = arith.subf %34, %37 : vector<2x8x8xf32>
    %39 = math.exp %38 : vector<2x8x8xf32>
    %cst_15 = arith.constant dense<0.000000e+00> : vector<2x8xf32>
    %40 = vector.multi_reduction <add>, %39, %cst_15 [2] : vector<2x8x8xf32> to vector<2x8xf32>
    %41 = vector.shape_cast %40 : vector<2x8xf32> to vector<2x8x1xf32>
    %42 = tpu.reciprocal %41 {approx = true} : vector<2x8x1xf32> -> vector<2x8x1xf32>
    %43 = vector.broadcast %42 : vector<2x8x1xf32> to vector<2x8x8xf32>
    %44 = arith.mulf %39, %43 : vector<2x8x8xf32>
    "tpu.trace_start"() <{level = 10 : i32, message = "hqk,hkd->hqd"}> : () -> ()
    %cst_16 = arith.constant dense<0.000000e+00> : vector<2x8x16xf32>
    %45 = tpu.matmul %44, %27, %cst_16 {dimension_numbers = #tpu.dot_dimension_numbers<[2], [1], [1], [2], [0, 0, 0, 1, 1, 2], [0], [0]>} : vector<2x8x8xf32>, vector<2x8x16xf32>, vector<2x8x16xf32> -> vector<2x8x16xf32>
    "tpu.trace_stop"() : () -> ()
    %46 = vector.extract_strided_slice %45 {offsets = [0, 0, 0], sizes = [1, 8, 16], strides = [1, 1, 1]} : vector<2x8x16xf32> to vector<1x8x16xf32>
    %47 = vector.shape_cast %46 : vector<1x8x16xf32> to vector<8x16xf32>
    %48 = vector.extract_strided_slice %45 {offsets = [1, 0, 0], sizes = [1, 8, 16], strides = [1, 1, 1]} : vector<2x8x16xf32> to vector<1x8x16xf32>
    %49 = vector.shape_cast %48 : vector<1x8x16xf32> to vector<8x16xf32>
    %50 = tpu.concatenate %47, %49 in 1 : vector<8x16xf32>, vector<8x16xf32> -> vector<8x32xf32>
    %51 = arith.truncf %50 : vector<8x32xf32> to vector<8x32xbf16>
    %c0_17 = arith.constant 0 : index
    %c0_18 = arith.constant 0 : index
    %c0_19 = arith.constant 0 : index
    %52 = vector.load %arg10[%c0_17, %c0_18, %c0_19] : memref<1x32x32xbf16, #tpu.memory_space<vmem>>, vector<1x32x32xbf16>
    %53 = vector.shape_cast %52 : vector<1x32x32xbf16> to vector<32x32xbf16>
    %cst_20 = arith.constant dense<0.000000e+00> : vector<8x32xf32>
    %54 = tpu.matmul %51, %53, %cst_20 {dimension_numbers = #tpu.dot_dimension_numbers<[1], [0], [0], [1], [0, 0, 1, 1], [], []>} : vector<8x32xbf16>, vector<32x32xbf16>, vector<8x32xf32> -> vector<8x32xf32>
    %c0_21 = arith.constant 0 : index
    %c0_22 = arith.constant 0 : index
    %c0_23 = arith.constant 0 : index
    %55 = vector.load %arg11[%c0_21, %c0_22, %c0_23] : memref<1x1x32xbf16, #tpu.memory_space<vmem>>, vector<1x1x32xbf16>
    %56 = vector.shape_cast %55 : vector<1x1x32xbf16> to vector<1x32xbf16>
    %57 = arith.extf %56 : vector<1x32xbf16> to vector<1x32xf32>
    %58 = vector.broadcast %57 : vector<1x32xf32> to vector<8x32xf32>
    %59 = arith.addf %54, %58 : vector<8x32xf32>
    %60 = arith.addf %59, %3 : vector<8x32xf32>
    %c0_24 = arith.constant 0 : index
    %c0_25 = arith.constant 0 : index
    %c0_26 = arith.constant 0 : index
    %61 = vector.load %arg12[%c0_24, %c0_25, %c0_26] : memref<1x1x32xbf16, #tpu.memory_space<vmem>>, vector<1x1x32xbf16>
    %62 = vector.shape_cast %61 : vector<1x1x32xbf16> to vector<1x32xbf16>
    %63 = arith.extf %62 : vector<1x32xbf16> to vector<1x32xf32>
    %c0_27 = arith.constant 0 : index
    %c0_28 = arith.constant 0 : index
    %c0_29 = arith.constant 0 : index
    %64 = vector.load %arg13[%c0_27, %c0_28, %c0_29] : memref<1x1x32xbf16, #tpu.memory_space<vmem>>, vector<1x1x32xbf16>
    %65 = vector.shape_cast %64 : vector<1x1x32xbf16> to vector<1x32xbf16>
    %66 = arith.extf %65 : vector<1x32xbf16> to vector<1x32xf32>
    %cst_30 = arith.constant dense<0.000000e+00> : vector<8xf32>
    %67 = vector.multi_reduction <add>, %60, %cst_30 [1] : vector<8x32xf32> to vector<8xf32>
    %68 = vector.shape_cast %67 : vector<8xf32> to vector<8x1xf32>
    %cst_31 = arith.constant 3.200000e+01 : f32
    %69 = vector.broadcast %cst_31 : f32 to vector<8x1xf32>
    %70 = arith.divf %68, %69 : vector<8x1xf32>
    %71 = vector.broadcast %70 : vector<8x1xf32> to vector<8x32xf32>
    %72 = arith.subf %60, %71 : vector<8x32xf32>
    %73 = arith.mulf %72, %72 : vector<8x32xf32>
    %cst_32 = arith.constant dense<0.000000e+00> : vector<8xf32>
    %74 = vector.multi_reduction <add>, %73, %cst_32 [1] : vector<8x32xf32> to vector<8xf32>
    %75 = vector.shape_cast %74 : vector<8xf32> to vector<8x1xf32>
    %cst_33 = arith.constant 3.200000e+01 : f32
    %76 = vector.broadcast %cst_33 : f32 to vector<8x1xf32>
    %77 = arith.divf %75, %76 : vector<8x1xf32>
    %78 = vector.broadcast %70 : vector<8x1xf32> to vector<8x32xf32>
    %79 = arith.subf %60, %78 : vector<8x32xf32>
    %cst_34 = arith.constant 9.99999996E-13 : f32
    %80 = vector.broadcast %cst_34 : f32 to vector<8x1xf32>
    %81 = arith.addf %77, %80 : vector<8x1xf32>
    %82 = math.rsqrt %81 : vector<8x1xf32>
    %83 = vector.broadcast %82 : vector<8x1xf32> to vector<8x32xf32>
    %84 = arith.mulf %79, %83 : vector<8x32xf32>
    %85 = vector.broadcast %63 : vector<1x32xf32> to vector<8x32xf32>
    %86 = arith.mulf %84, %85 : vector<8x32xf32>
    %87 = vector.broadcast %66 : vector<1x32xf32> to vector<8x32xf32>
    %88 = arith.addf %86, %87 : vector<8x32xf32>
    %89 = arith.truncf %88 : vector<8x32xf32> to vector<8x32xbf16>
    %c0_35 = arith.constant 0 : index
    %c0_36 = arith.constant 0 : index
    %c0_37 = arith.constant 0 : index
    %90 = vector.load %arg14[%c0_35, %c0_36, %c0_37] : memref<1x32x64xbf16, #tpu.memory_space<vmem>>, vector<1x32x64xbf16>
    %91 = vector.shape_cast %90 : vector<1x32x64xbf16> to vector<32x64xbf16>
    %cst_38 = arith.constant dense<0.000000e+00> : vector<8x64xf32>
    %92 = tpu.matmul %89, %91, %cst_38 {dimension_numbers = #tpu.dot_dimension_numbers<[1], [0], [0], [1], [0, 0, 1, 1], [], []>} : vector<8x32xbf16>, vector<32x64xbf16>, vector<8x64xf32> -> vector<8x64xf32>
    %c0_39 = arith.constant 0 : index
    %c0_40 = arith.constant 0 : index
    %c0_41 = arith.constant 0 : index
    %93 = vector.load %arg15[%c0_39, %c0_40, %c0_41] : memref<1x1x64xbf16, #tpu.memory_space<vmem>>, vector<1x1x64xbf16>
    %94 = vector.shape_cast %93 : vector<1x1x64xbf16> to vector<1x64xbf16>
    %95 = arith.extf %94 : vector<1x64xbf16> to vector<1x64xf32>
    %96 = vector.broadcast %95 : vector<1x64xf32> to vector<8x64xf32>
    %97 = arith.addf %92, %96 : vector<8x64xf32>
    %cst_42 = arith.constant 5.000000e-01 : f32
    %98 = vector.broadcast %cst_42 : f32 to vector<8x64xf32>
    %99 = arith.mulf %98, %97 : vector<8x64xf32>
    %cst_43 = arith.constant 4.471500e-02 : f32
    %100 = vector.broadcast %cst_43 : f32 to vector<8x64xf32>
    %101 = arith.mulf %100, %97 : vector<8x64xf32>
    %102 = arith.mulf %101, %97 : vector<8x64xf32>
    %103 = arith.mulf %102, %97 : vector<8x64xf32>
    %104 = arith.addf %97, %103 : vector<8x64xf32>
    %cst_44 = arith.constant 0.797884583 : f32
    %105 = vector.broadcast %cst_44 : f32 to vector<8x64xf32>
    %106 = arith.mulf %105, %104 : vector<8x64xf32>
    %107 = math.tanh %106 : vector<8x64xf32>
    %cst_45 = arith.constant 1.000000e+00 : f32
    %108 = vector.broadcast %cst_45 : f32 to vector<8x64xf32>
    %109 = arith.addf %108, %107 : vector<8x64xf32>
    %110 = arith.mulf %99, %109 : vector<8x64xf32>
    %111 = arith.truncf %110 : vector<8x64xf32> to vector<8x64xbf16>
    %c0_46 = arith.constant 0 : index
    %c0_47 = arith.constant 0 : index
    %c0_48 = arith.constant 0 : index
    %112 = vector.load %arg16[%c0_46, %c0_47, %c0_48] : memref<1x64x32xbf16, #tpu.memory_space<vmem>>, vector<1x64x32xbf16>
    %113 = vector.shape_cast %112 : vector<1x64x32xbf16> to vector<64x32xbf16>
    %cst_49 = arith.constant dense<0.000000e+00> : vector<8x32xf32>
    %114 = tpu.matmul %111, %113, %cst_49 {dimension_numbers = #tpu.dot_dimension_numbers<[1], [0], [0], [1], [0, 0, 1, 1], [], []>} : vector<8x64xbf16>, vector<64x32xbf16>, vector<8x32xf32> -> vector<8x32xf32>
    %c0_50 = arith.constant 0 : index
    %c0_51 = arith.constant 0 : index
    %c0_52 = arith.constant 0 : index
    %115 = vector.load %arg17[%c0_50, %c0_51, %c0_52] : memref<1x1x32xbf16, #tpu.memory_space<vmem>>, vector<1x1x32xbf16>
    %116 = vector.shape_cast %115 : vector<1x1x32xbf16> to vector<1x32xbf16>
    %117 = arith.extf %116 : vector<1x32xbf16> to vector<1x32xf32>
    %118 = vector.broadcast %117 : vector<1x32xf32> to vector<8x32xf32>
    %119 = arith.addf %114, %118 : vector<8x32xf32>
    %120 = arith.addf %119, %88 : vector<8x32xf32>
    %c0_53 = arith.constant 0 : index
    %c0_54 = arith.constant 0 : index
    %c0_55 = arith.constant 0 : index
    %121 = vector.load %arg18[%c0_53, %c0_54, %c0_55] : memref<1x1x32xbf16, #tpu.memory_space<vmem>>, vector<1x1x32xbf16>
    %122 = vector.shape_cast %121 : vector<1x1x32xbf16> to vector<1x32xbf16>
    %123 = arith.extf %122 : vector<1x32xbf16> to vector<1x32xf32>
    %c0_56 = arith.constant 0 : index
    %c0_57 = arith.constant 0 : index
    %c0_58 = arith.constant 0 : index
    %124 = vector.load %arg19[%c0_56, %c0_57, %c0_58] : memref<1x1x32xbf16, #tpu.memory_space<vmem>>, vector<1x1x32xbf16>
    %125 = vector.shape_cast %124 : vector<1x1x32xbf16> to vector<1x32xbf16>
    %126 = arith.extf %125 : vector<1x32xbf16> to vector<1x32xf32>
    %cst_59 = arith.constant dense<0.000000e+00> : vector<8xf32>
    %127 = vector.multi_reduction <add>, %120, %cst_59 [1] : vector<8x32xf32> to vector<8xf32>
    %128 = vector.shape_cast %127 : vector<8xf32> to vector<8x1xf32>
    %cst_60 = arith.constant 3.200000e+01 : f32
    %129 = vector.broadcast %cst_60 : f32 to vector<8x1xf32>
    %130 = arith.divf %128, %129 : vector<8x1xf32>
    %131 = vector.broadcast %130 : vector<8x1xf32> to vector<8x32xf32>
    %132 = arith.subf %120, %131 : vector<8x32xf32>
    %133 = arith.mulf %132, %132 : vector<8x32xf32>
    %cst_61 = arith.constant dense<0.000000e+00> : vector<8xf32>
    %134 = vector.multi_reduction <add>, %133, %cst_61 [1] : vector<8x32xf32> to vector<8xf32>
    %135 = vector.shape_cast %134 : vector<8xf32> to vector<8x1xf32>
    %cst_62 = arith.constant 3.200000e+01 : f32
    %136 = vector.broadcast %cst_62 : f32 to vector<8x1xf32>
    %137 = arith.divf %135, %136 : vector<8x1xf32>
    %138 = vector.broadcast %130 : vector<8x1xf32> to vector<8x32xf32>
    %139 = arith.subf %120, %138 : vector<8x32xf32>
    %cst_63 = arith.constant 9.99999996E-13 : f32
    %140 = vector.broadcast %cst_63 : f32 to vector<8x1xf32>
    %141 = arith.addf %137, %140 : vector<8x1xf32>
    %142 = math.rsqrt %141 : vector<8x1xf32>
    %143 = vector.broadcast %142 : vector<8x1xf32> to vector<8x32xf32>
    %144 = arith.mulf %139, %143 : vector<8x32xf32>
    %145 = vector.broadcast %123 : vector<1x32xf32> to vector<8x32xf32>
    %146 = arith.mulf %144, %145 : vector<8x32xf32>
    %147 = vector.broadcast %126 : vector<1x32xf32> to vector<8x32xf32>
    %148 = arith.addf %146, %147 : vector<8x32xf32>
    %c0_64 = arith.constant 0 : index
    %c0_65 = arith.constant 0 : index
    %149 = vector.load %arg21[%c0_64, %c0_65] : memref<8x32xf32, #tpu.memory_space<vmem>>, vector<8x32xf32>
    tpu.vector_store %arg21[%c0_64, %c0_65], %148 {strides = array<i32>} : memref<8x32xf32, #tpu.memory_space<vmem>>, vector<8x32xf32>,
    %c1_i32 = arith.constant 1 : i32
    %150 = arith.cmpi eq, %arg1, %c1_i32 : i32
    %151 = arith.extui %150 : i1 to i32
    %c0_i32_66 = arith.constant 0 : i32
    %152 = arith.cmpi ne, %151, %c0_i32_66 : i32
    scf.if %152 {
      %153 = arith.truncf %148 : vector<8x32xf32> to vector<8x32xbf16>
      %c0_67 = arith.constant 0 : index
      %c0_68 = arith.constant 0 : index
      %c0_69 = arith.constant 0 : index
      %154 = vector.load %arg20[%c0_67, %c0_68, %c0_69] : memref<1x8x32xbf16, #tpu.memory_space<vmem>>, vector<1x8x32xbf16>
      %155 = vector.shape_cast %154 : vector<1x8x32xbf16> to vector<8x32xbf16>
      %156 = vector.shape_cast %153 : vector<8x32xbf16> to vector<1x8x32xbf16>
      tpu.vector_store %arg20[%c0_67, %c0_68, %c0_69], %156 {strides = array<i32>} : memref<1x8x32xbf16, #tpu.memory_space<vmem>>, vector<1x8x32xbf16>,
    } else {
    }
    return
  }
  func.func @transform_0(%arg0: i32, %arg1: i32) -> (i32, i32, i32) {
    %c0_i32 = arith.constant 0 : i32
    %c0_i32_0 = arith.constant 0 : i32
    %c0_i32_1 = arith.constant 0 : i32
    return %arg0, %c0_i32, %c0_i32_0 : i32, i32, i32
  }
  func.func @transform_1(%arg0: i32, %arg1: i32) -> (i32, i32, i32) {
    %c0_i32 = arith.constant 0 : i32
    %c0_i32_0 = arith.constant 0 : i32
    %c0_i32_1 = arith.constant 0 : i32
    %c0_i32_2 = arith.constant 0 : i32
    return %c0_i32, %c0_i32_0, %c0_i32_1 : i32, i32, i32
  }
  func.func @transform_2(%arg0: i32, %arg1: i32) -> (i32, i32, i32) {
    %c0_i32 = arith.constant 0 : i32
    %c0_i32_0 = arith.constant 0 : i32
    %c0_i32_1 = arith.constant 0 : i32
    return %arg0, %c0_i32, %c0_i32_0 : i32, i32, i32
  }
  func.func @transform_3(%arg0: i32, %arg1: i32) -> (i32, i32) {
    %c0_i32 = arith.constant 0 : i32
    %c0_i32_0 = arith.constant 0 : i32
    %c0_i32_1 = arith.constant 0 : i32
    return %c0_i32, %c0_i32_0 : i32, i32
  }
  func.func @transform_4(%arg0: i32, %arg1: i32) -> (i32, i32) {
    %c0_i32 = arith.constant 0 : i32
    %c0_i32_0 = arith.constant 0 : i32
    %c0_i32_1 = arith.constant 0 : i32
    return %c0_i32, %c0_i32_0 : i32, i32
  }
  func.func @transform_5(%arg0: i32, %arg1: i32) -> (i32, i32, i32, i32) {
    %c0_i32 = arith.constant 0 : i32
    %c0_i32_0 = arith.constant 0 : i32
    %c0_i32_1 = arith.constant 0 : i32
    %c0_i32_2 = arith.constant 0 : i32
    return %arg0, %c0_i32, %c0_i32_0, %c0_i32_1 : i32, i32, i32, i32
  }
  func.func @transform_6(%arg0: i32, %arg1: i32) -> (i32, i32, i32) {
    %c0_i32 = arith.constant 0 : i32
    %c0_i32_0 = arith.constant 0 : i32
    %c0_i32_1 = arith.constant 0 : i32
    return %arg1, %c0_i32, %c0_i32_0 : i32, i32, i32
  }
  func.func @transform_7(%arg0: i32, %arg1: i32) -> (i32, i32, i32) {
    %c0_i32 = arith.constant 0 : i32
    %c0_i32_0 = arith.constant 0 : i32
    %c0_i32_1 = arith.constant 0 : i32
    return %arg1, %c0_i32, %c0_i32_0 : i32, i32, i32
  }
  func.func @transform_8(%arg0: i32, %arg1: i32) -> (i32, i32, i32) {
    %c0_i32 = arith.constant 0 : i32
    %c0_i32_0 = arith.constant 0 : i32
    %c0_i32_1 = arith.constant 0 : i32
    return %arg1, %c0_i32, %c0_i32_0 : i32, i32, i32
  }
  func.func @transform_9(%arg0: i32, %arg1: i32) -> (i32, i32, i32) {
    %c0_i32 = arith.constant 0 : i32
    %c0_i32_0 = arith.constant 0 : i32
    %c0_i32_1 = arith.constant 0 : i32
    return %arg1, %c0_i32, %c0_i32_0 : i32, i32, i32
  }
  func.func @transform_10(%arg0: i32, %arg1: i32) -> (i32, i32, i32) {
    %c0_i32 = arith.constant 0 : i32
    %c0_i32_0 = arith.constant 0 : i32
    %c0_i32_1 = arith.constant 0 : i32
    return %arg1, %c0_i32, %c0_i32_0 : i32, i32, i32
  }
  func.func @transform_11(%arg0: i32, %arg1: i32) -> (i32, i32, i32) {
    %c0_i32 = arith.constant 0 : i32
    %c0_i32_0 = arith.constant 0 : i32
    %c0_i32_1 = arith.constant 0 : i32
    return %arg1, %c0_i32, %c0_i32_0 : i32, i32, i32
  }
  func.func @transform_12(%arg0: i32, %arg1: i32) -> (i32, i32, i32) {
    %c0_i32 = arith.constant 0 : i32
    %c0_i32_0 = arith.constant 0 : i32
    %c0_i32_1 = arith.constant 0 : i32
    return %arg1, %c0_i32, %c0_i32_0 : i32, i32, i32
  }
  func.func @transform_13(%arg0: i32, %arg1: i32) -> (i32, i32, i32) {
    %c0_i32 = arith.constant 0 : i32
    %c0_i32_0 = arith.constant 0 : i32
    %c0_i32_1 = arith.constant 0 : i32
    return %arg1, %c0_i32, %c0_i32_0 : i32, i32, i32
  }
  func.func @transform_14(%arg0: i32, %arg1: i32) -> (i32, i32, i32) {
    %c0_i32 = arith.constant 0 : i32
    %c0_i32_0 = arith.constant 0 : i32
    %c0_i32_1 = arith.constant 0 : i32
    return %arg1, %c0_i32, %c0_i32_0 : i32, i32, i32
  }
  func.func @transform_15(%arg0: i32, %arg1: i32) -> (i32, i32, i32) {
    %c0_i32 = arith.constant 0 : i32
    %c0_i32_0 = arith.constant 0 : i32
    %c0_i32_1 = arith.constant 0 : i32
    return %arg1, %c0_i32, %c0_i32_0 : i32, i32, i32
  }
  func.func @transform_16(%arg0: i32, %arg1: i32) -> (i32, i32, i32) {
    %c0_i32 = arith.constant 0 : i32
    %c0_i32_0 = arith.constant 0 : i32
    %c0_i32_1 = arith.constant 0 : i32
    return %arg1, %c0_i32, %c0_i32_0 : i32, i32, i32
  }
  func.func @transform_17(%arg0: i32, %arg1: i32) -> (i32, i32, i32) {
    %c0_i32 = arith.constant 0 : i32
    %c0_i32_0 = arith.constant 0 : i32
    %c0_i32_1 = arith.constant 0 : i32
    return %arg1, %c0_i32, %c0_i32_0 : i32, i32, i32
  }
  func.func @transform_18(%arg0: i32, %arg1: i32) -> (i32, i32, i32) {
    %c0_i32 = arith.constant 0 : i32
    %c0_i32_0 = arith.constant 0 : i32
    %c0_i32_1 = arith.constant 0 : i32
    return %arg0, %c0_i32, %c0_i32_0 : i32, i32, i32
  }
}

</mosaic_0001>

<llo_original>
// kernel: tpu_custom_call.1
$region0: #{tpu_custom_call.1}
  #allocation0 [shape = 'u32[]', space=smem, size = 0x4, offset = 0x4, fixed_abs, tag = 'smem constant byte address 0x4 - core index']
  #allocation1 [shape = 'u32[144,128]{1,0:T(1,128)}', space=vmem, size = 0x12000, scoped, tag = 'internal scratch']
  #allocation2 [shape = 'f32[8,32]{1,0:T(8,128)}', space=vmem, size = 0x1000, scoped, tag = 'scratch operand']
  %s0 = inlined_call_operand.vmem [shape: bf16[2,8,32], index: 0, kind: input, shape index: {}]
  %s1 = inlined_call_operand.hbm [shape: bf16[1,8,32], index: 1, kind: input, shape index: {}]
  %s2 = inlined_call_operand.vmem [shape: bf16[2,8,32], index: 2, kind: input, shape index: {}]
  %s3 = inlined_call_operand.vmem [shape: bf16[1,32], index: 3, kind: input, shape index: {}]
  %s4 = inlined_call_operand.hbm [shape: bf16[1,32], index: 4, kind: input, shape index: {}]
  %s5 = inlined_call_operand.hbm [shape: f32[2,1,1,8], index: 5, kind: input, shape index: {}]
  %s6 = inlined_call_operand.vmem [shape: bf16[2,32,96], index: 6, kind: input, shape index: {}]
  %s7 = inlined_call_operand.vmem [shape: bf16[2,1,96], index: 7, kind: input, shape index: {}]
  %s8 = inlined_call_operand.vmem [shape: bf16[2,32,32], index: 8, kind: input, shape index: {}]
  %s9 = inlined_call_operand.vmem [shape: bf16[2,1,32], index: 9, kind: input, shape index: {}]
  %s10 = inlined_call_operand.vmem [shape: bf16[2,1,32], index: 10, kind: input, shape index: {}]
  %s11 = inlined_call_operand.vmem [shape: bf16[2,1,32], index: 11, kind: input, shape index: {}]
  %s12 = inlined_call_operand.vmem [shape: bf16[2,32,64], index: 12, kind: input, shape index: {}]
  %s13 = inlined_call_operand.vmem [shape: bf16[2,1,64], index: 13, kind: input, shape index: {}]
  %s14 = inlined_call_operand.vmem [shape: bf16[2,64,32], index: 14, kind: input, shape index: {}]
  %s15 = inlined_call_operand.vmem [shape: bf16[2,1,32], index: 15, kind: input, shape index: {}]
  %s16 = inlined_call_operand.vmem [shape: bf16[2,1,32], index: 16, kind: input, shape index: {}]
  %s17 = inlined_call_operand.vmem [shape: bf16[2,1,32], index: 17, kind: input, shape index: {}]
  %s18 = inlined_call_operand.hbm [shape: bf16[2,8,32], index: 18, kind: output, shape index: {}]
  %s19 = sld [smem:[#allocation0]]
  $region125: #{tpu_custom_call.1} parent=0
    _
  %s21 = ssub.s32 1, %s19
  %s22 = scalar_select 0, %s21, %s19
  $region1: #{tpu_custom_call.1} parent=0
    #allocation3 [shape = 'u8[2048]{0}', space=vmem, size = 0x800, scoped, tag = 'input window, operand 1, single buffered']
    #allocation4 [shape = 's32[2]{0}', space=sflag, size = 0x8, scoped, tag = 'scoped memory for tpu_custom_call.1']
    #allocation5 [shape = 's32[2]{0}', space=sflag, size = 0x8, scoped, tag = 'scoped memory for tpu_custom_call.1']
    #allocation6 [shape = 'u8[512]{0}', space=vmem, size = 0x400, scoped, tag = 'input window, operand 4, single buffered']
    #allocation7 [shape = 's32[1]{0}', space=sflag, size = 0x4, scoped, tag = 'scoped memory for tpu_custom_call.1']
    #allocation8 [shape = 'u8[1024]{0}', space=vmem, size = 0x400, scoped, tag = 'input window, operand 5']
    #allocation9 [shape = 'u8[4096]{0}', space=vmem, size = 0x1000, scoped, tag = 'output window, operand 0']
    %23 = vsyncpa [#allocation4], 0
    %24 = vsyncpa [#allocation7], 0
    %25 = vsyncpa [#allocation5], 0
    %s26 = scalar_lea.sflag [#allocation5], 1
    %27 = vsyncpa %s26, 0
    loop: start=0, step=1, limit=6
    $region2: #{tpu_custom_call.1} parent=1 // loop_pre_header
      _
    $region3: #{tpu_custom_call.1} parent=1 // loop_header
      %s29 = sphi 0, %s33
      %p30 = scmp.ge.s32.totalorder %s29, 6
      %s36 = sphi 0, %s48
      %s37 = sphi 0, %s44
      %s38 = sphi 0, %s36
      %s39 = sphi 0, %s37
      %s40 = sphi 0, %s38
      %s41 = sphi 0, %s39
      %s51 = sphi 0, %s53
      %s54 = sphi 0, %s51
      %s55 = sphi 0, %s54
      %s71 = sphi 0, %s55
      %s75 = sphi 0, %s75
      %s77 = sphi 0, %s75
      %s78 = sphi 0, %s77
      %s92 = sphi 0, %s78
      %s98 = sphi 0, %s100
      %s101 = sphi 0, %s98
      %s102 = sphi 0, %s101
      %s118 = sphi 0, %s102
      %s122 = sphi 0, %s122
      %s124 = sphi 0, %s122
      %s125 = sphi 0, %s124
      %s139 = sphi 0, %s125
      %s143 = sphi 0, %s143
      %s145 = sphi 0, %s143
      %s146 = sphi 0, %s145
      %s160 = sphi 0, %s146
      %s166 = sphi 0, %s168
      %s169 = sphi 0, %s166
      %s170 = sphi 0, %s169
      %s186 = sphi 0, %s170
      %s192 = sphi 0, %s194
      %s195 = sphi 0, %s192
      %s196 = sphi 0, %s195
      %s212 = sphi 0, %s196
      %s218 = sphi 0, %s220
      %s221 = sphi 0, %s218
      %s222 = sphi 0, %s221
      %s238 = sphi 0, %s222
      %s244 = sphi 0, %s246
      %s247 = sphi 0, %s244
      %s248 = sphi 0, %s247
      %s264 = sphi 0, %s248
      %s270 = sphi 0, %s272
      %s273 = sphi 0, %s270
      %s274 = sphi 0, %s273
      %s290 = sphi 0, %s274
      %s296 = sphi 0, %s298
      %s299 = sphi 0, %s296
      %s300 = sphi 0, %s299
      %s316 = sphi 0, %s300
      %s322 = sphi 0, %s324
      %s325 = sphi 0, %s322
      %s326 = sphi 0, %s325
      %s342 = sphi 0, %s326
      %s348 = sphi 0, %s350
      %s351 = sphi 0, %s348
      %s352 = sphi 0, %s351
      %s368 = sphi 0, %s352
      %s374 = sphi 0, %s376
      %s377 = sphi 0, %s374
      %s378 = sphi 0, %s377
      %s394 = sphi 0, %s378
      %s400 = sphi 0, %s402
      %s403 = sphi 0, %s400
      %s404 = sphi 0, %s403
      %s420 = sphi 0, %s404
      %s426 = sphi 0, %s428
      %s429 = sphi 0, %s426
      %s430 = sphi 0, %s429
      %s446 = sphi 0, %s430
      %s452 = sphi 0, %s454
      %s455 = sphi 0, %s452
      %s456 = sphi 0, %s455
      %s472 = sphi 0, %s456
      %s478 = sphi 0, %s480
      %s481 = sphi 0, %s478
      %s482 = sphi 0, %s481
      %s498 = sphi 0, %s482
      %s504 = sphi 0, %s506
      %s507 = sphi 0, %s504
      %s508 = sphi 0, %s507
      %s524 = sphi 0, %s508
    $region4: #{tpu_custom_call.1} parent=1 // loop_header_branch
      %32 = sbr.rel (%p30) target = $region8
    $region5: #{tpu_custom_call.1} parent=1 // loop_body
      %s34 = ssub.s32 %s29, 1
      %s35 = ssub.s32 %s29, 2
      %s42 = sadd.s32 1, %s37
      %p43 = scmp.ge.s32.totalorder %s42, 2
      %s44 = scalar_select %p43, 0, %s42
      %s45 = sadd.s32 1, %s36
      %s46 = scalar_select %p43, %s45, %s36
      %p47 = scmp.ge.s32.totalorder %s46, 2
      %s48 = scalar_select %p47, 0, %s46
      %s49 = ssub.s32 %s36, %s48
      %p50 = scmp.eq.s32.totalorder %s49, 0
      %s52 = sadd.s32 %s51, 1
      %s53 = scalar_select %p50, %s51, %s52
      %p56 = pneg %p50
      %p57 = scmp.eq.s32.totalorder %s29, 3
      %p58 = por %p56, %p57
      %p59 = scmp.ne.s32.totalorder %s51, %s54
      %p60 = scmp.eq.s32.totalorder %s29, 0
      %p61 = por %p59, %p60
      %p62 = scmp.ne.s32.totalorder %s51, %s54
      %p63 = scmp.eq.s32.totalorder %s34, 3
      %p64 = por %p62, %p63
      %p65 = scmp.ne.s32.totalorder %s54, %s55
      %p66 = scmp.eq.s32.totalorder %s34, 0
      %p67 = por %p65, %p66
      %p68 = scmp.ne.s32.totalorder %s54, %s55
      %p69 = scmp.eq.s32.totalorder %s35, 3
      %p70 = por %p68, %p69
      %p72 = scmp.ne.s32.totalorder %s55, %s71
      %p73 = scmp.eq.s32.totalorder %s35, 0
      %p74 = por %p72, %p73
      %s76 = sadd.s32 %s75, 1
      %p79 = scmp.eq.s32.totalorder %s29, 3
      %p80 = scmp.ne.s32.totalorder %s75, %s77
      %p81 = scmp.eq.s32.totalorder %s29, 0
      %p82 = por %p80, %p81
      %p83 = scmp.ne.s32.totalorder %s75, %s77
      %p84 = scmp.eq.s32.totalorder %s34, 3
      %p85 = por %p83, %p84
      %p86 = scmp.ne.s32.totalorder %s77, %s78
      %p87 = scmp.eq.s32.totalorder %s34, 0
      %p88 = por %p86, %p87
      %p89 = scmp.ne.s32.totalorder %s77, %s78
      %p90 = scmp.eq.s32.totalorder %s35, 3
      %p91 = por %p89, %p90
      %p93 = scmp.ne.s32.totalorder %s78, %s92
      %p94 = scmp.eq.s32.totalorder %s35, 0
      %p95 = por %p93, %p94
      %s96 = ssub.s32 %s36, %s48
      %p97 = scmp.eq.s32.totalorder %s96, 0
      %s99 = sadd.s32 %s98, 1
      %s100 = scalar_select %p97, %s98, %s99
      %p103 = pneg %p97
      %p104 = scmp.eq.s32.totalorder %s29, 3
      %p105 = por %p103, %p104
      %p106 = scmp.ne.s32.totalorder %s98, %s101
      %p107 = scmp.eq.s32.totalorder %s29, 0
      %p108 = por %p106, %p107
      %p109 = scmp.ne.s32.totalorder %s98, %s101
      %p110 = scmp.eq.s32.totalorder %s34, 3
      %p111 = por %p109, %p110
      %p112 = scmp.ne.s32.totalorder %s101, %s102
      %p113 = scmp.eq.s32.totalorder %s34, 0
      %p114 = por %p112, %p113
      %p115 = scmp.ne.s32.totalorder %s101, %s102
      %p116 = scmp.eq.s32.totalorder %s35, 3
      %p117 = por %p115, %p116
      %p119 = scmp.ne.s32.totalorder %s102, %s118
      %p120 = scmp.eq.s32.totalorder %s35, 0
      %p121 = por %p119, %p120
      %s123 = sadd.s32 %s122, 1
      %p126 = scmp.eq.s32.totalorder %s29, 3
      %p127 = scmp.ne.s32.totalorder %s122, %s124
      %p128 = scmp.eq.s32.totalorder %s29, 0
      %p129 = por %p127, %p128
      %p130 = scmp.ne.s32.totalorder %s122, %s124
      %p131 = scmp.eq.s32.totalorder %s34, 3
      %p132 = por %p130, %p131
      %p133 = scmp.ne.s32.totalorder %s124, %s125
      %p134 = scmp.eq.s32.totalorder %s34, 0
      %p135 = por %p133, %p134
      %p136 = scmp.ne.s32.totalorder %s124, %s125
      %p137 = scmp.eq.s32.totalorder %s35, 3
      %p138 = por %p136, %p137
      %p140 = scmp.ne.s32.totalorder %s125, %s139
      %p141 = scmp.eq.s32.totalorder %s35, 0
      %p142 = por %p140, %p141
      %s144 = sadd.s32 %s143, 1
      %p147 = scmp.eq.s32.totalorder %s29, 3
      %p148 = scmp.ne.s32.totalorder %s143, %s145
      %p149 = scmp.eq.s32.totalorder %s29, 0
      %p150 = por %p148, %p149
      %p151 = scmp.ne.s32.totalorder %s143, %s145
      %p152 = scmp.eq.s32.totalorder %s34, 3
      %p153 = por %p151, %p152
      %p154 = scmp.ne.s32.totalorder %s145, %s146
      %p155 = scmp.eq.s32.totalorder %s34, 0
      %p156 = por %p154, %p155
      %p157 = scmp.ne.s32.totalorder %s145, %s146
      %p158 = scmp.eq.s32.totalorder %s35, 3
      %p159 = por %p157, %p158
      %p161 = scmp.ne.s32.totalorder %s146, %s160
      %p162 = scmp.eq.s32.totalorder %s35, 0
      %p163 = por %p161, %p162
      %s164 = ssub.s32 %s36, %s48
      %p165 = scmp.eq.s32.totalorder %s164, 0
      %s167 = sadd.s32 %s166, 1
      %s168 = scalar_select %p165, %s166, %s167
      %p171 = pneg %p165
      %p172 = scmp.eq.s32.totalorder %s29, 3
      %p173 = por %p171, %p172
      %p174 = scmp.ne.s32.totalorder %s166, %s169
      %p175 = scmp.eq.s32.totalorder %s29, 0
      %p176 = por %p174, %p175
      %p177 = scmp.ne.s32.totalorder %s166, %s169
      %p178 = scmp.eq.s32.totalorder %s34, 3
      %p179 = por %p177, %p178
      %p180 = scmp.ne.s32.totalorder %s169, %s170
      %p181 = scmp.eq.s32.totalorder %s34, 0
      %p182 = por %p180, %p181
      %p183 = scmp.ne.s32.totalorder %s169, %s170
      %p184 = scmp.eq.s32.totalorder %s35, 3
      %p185 = por %p183, %p184
      %p187 = scmp.ne.s32.totalorder %s170, %s186
      %p188 = scmp.eq.s32.totalorder %s35, 0
      %p189 = por %p187, %p188
      %s190 = ssub.s32 %s37, %s44
      %p191 = scmp.eq.s32.totalorder %s190, 0
      %s193 = sadd.s32 %s192, 1
      %s194 = scalar_select %p191, %s192, %s193
      %p197 = pneg %p191
      %p198 = scmp.eq.s32.totalorder %s29, 3
      %p199 = por %p197, %p198
      %p200 = scmp.ne.s32.totalorder %s192, %s195
      %p201 = scmp.eq.s32.totalorder %s29, 0
      %p202 = por %p200, %p201
      %p203 = scmp.ne.s32.totalorder %s192, %s195
      %p204 = scmp.eq.s32.totalorder %s34, 3
      %p205 = por %p203, %p204
      %p206 = scmp.ne.s32.totalorder %s195, %s196
      %p207 = scmp.eq.s32.totalorder %s34, 0
      %p208 = por %p206, %p207
      %p209 = scmp.ne.s32.totalorder %s195, %s196
      %p210 = scmp.eq.s32.totalorder %s35, 3
      %p211 = por %p209, %p210
      %p213 = scmp.ne.s32.totalorder %s196, %s212
      %p214 = scmp.eq.s32.totalorder %s35, 0
      %p215 = por %p213, %p214
      %s216 = ssub.s32 %s37, %s44
      %p217 = scmp.eq.s32.totalorder %s216, 0
      %s219 = sadd.s32 %s218, 1
      %s220 = scalar_select %p217, %s218, %s219
      %p223 = pneg %p217
      %p224 = scmp.eq.s32.totalorder %s29, 3
      %p225 = por %p223, %p224
      %p226 = scmp.ne.s32.totalorder %s218, %s221
      %p227 = scmp.eq.s32.totalorder %s29, 0
      %p228 = por %p226, %p227
      %p229 = scmp.ne.s32.totalorder %s218, %s221
      %p230 = scmp.eq.s32.totalorder %s34, 3
      %p231 = por %p229, %p230
      %p232 = scmp.ne.s32.totalorder %s221, %s222
      %p233 = scmp.eq.s32.totalorder %s34, 0
      %p234 = por %p232, %p233
      %p235 = scmp.ne.s32.totalorder %s221, %s222
      %p236 = scmp.eq.s32.totalorder %s35, 3
      %p237 = por %p235, %p236
      %p239 = scmp.ne.s32.totalorder %s222, %s238
      %p240 = scmp.eq.s32.totalorder %s35, 0
      %p241 = por %p239, %p240
      %s242 = ssub.s32 %s37, %s44
      %p243 = scmp.eq.s32.totalorder %s242, 0
      %s245 = sadd.s32 %s244, 1
      %s246 = scalar_select %p243, %s244, %s245
      %p249 = pneg %p243
      %p250 = scmp.eq.s32.totalorder %s29, 3
      %p251 = por %p249, %p250
      %p252 = scmp.ne.s32.totalorder %s244, %s247
      %p253 = scmp.eq.s32.totalorder %s29, 0
      %p254 = por %p252, %p253
      %p255 = scmp.ne.s32.totalorder %s244, %s247
      %p256 = scmp.eq.s32.totalorder %s34, 3
      %p257 = por %p255, %p256
      %p258 = scmp.ne.s32.totalorder %s247, %s248
      %p259 = scmp.eq.s32.totalorder %s34, 0
      %p260 = por %p258, %p259
      %p261 = scmp.ne.s32.totalorder %s247, %s248
      %p262 = scmp.eq.s32.totalorder %s35, 3
      %p263 = por %p261, %p262
      %p265 = scmp.ne.s32.totalorder %s248, %s264
      %p266 = scmp.eq.s32.totalorder %s35, 0
      %p267 = por %p265, %p266
      %s268 = ssub.s32 %s37, %s44
      %p269 = scmp.eq.s32.totalorder %s268, 0
      %s271 = sadd.s32 %s270, 1
      %s272 = scalar_select %p269, %s270, %s271
      %p275 = pneg %p269
      %p276 = scmp.eq.s32.totalorder %s29, 3
      %p277 = por %p275, %p276
      %p278 = scmp.ne.s32.totalorder %s270, %s273
      %p279 = scmp.eq.s32.totalorder %s29, 0
      %p280 = por %p278, %p279
      %p281 = scmp.ne.s32.totalorder %s270, %s273
      %p282 = scmp.eq.s32.totalorder %s34, 3
      %p283 = por %p281, %p282
      %p284 = scmp.ne.s32.totalorder %s273, %s274
      %p285 = scmp.eq.s32.totalorder %s34, 0
      %p286 = por %p284, %p285
      %p287 = scmp.ne.s32.totalorder %s273, %s274
      %p288 = scmp.eq.s32.totalorder %s35, 3
      %p289 = por %p287, %p288
      %p291 = scmp.ne.s32.totalorder %s274, %s290
      %p292 = scmp.eq.s32.totalorder %s35, 0
      %p293 = por %p291, %p292
      %s294 = ssub.s32 %s37, %s44
      %p295 = scmp.eq.s32.totalorder %s294, 0
      %s297 = sadd.s32 %s296, 1
      %s298 = scalar_select %p295, %s296, %s297
      %p301 = pneg %p295
      %p302 = scmp.eq.s32.totalorder %s29, 3
      %p303 = por %p301, %p302
      %p304 = scmp.ne.s32.totalorder %s296, %s299
      %p305 = scmp.eq.s32.totalorder %s29, 0
      %p306 = por %p304, %p305
      %p307 = scmp.ne.s32.totalorder %s296, %s299
      %p308 = scmp.eq.s32.totalorder %s34, 3
      %p309 = por %p307, %p308
      %p310 = scmp.ne.s32.totalorder %s299, %s300
      %p311 = scmp.eq.s32.totalorder %s34, 0
      %p312 = por %p310, %p311
      %p313 = scmp.ne.s32.totalorder %s299, %s300
      %p314 = scmp.eq.s32.totalorder %s35, 3
      %p315 = por %p313, %p314
      %p317 = scmp.ne.s32.totalorder %s300, %s316
      %p318 = scmp.eq.s32.totalorder %s35, 0
      %p319 = por %p317, %p318
      %s320 = ssub.s32 %s37, %s44
      %p321 = scmp.eq.s32.totalorder %s320, 0
      %s323 = sadd.s32 %s322, 1
      %s324 = scalar_select %p321, %s322, %s323
      %p327 = pneg %p321
      %p328 = scmp.eq.s32.totalorder %s29, 3
      %p329 = por %p327, %p328
      %p330 = scmp.ne.s32.totalorder %s322, %s325
      %p331 = scmp.eq.s32.totalorder %s29, 0
      %p332 = por %p330, %p331
      %p333 = scmp.ne.s32.totalorder %s322, %s325
      %p334 = scmp.eq.s32.totalorder %s34, 3
      %p335 = por %p333, %p334
      %p336 = scmp.ne.s32.totalorder %s325, %s326
      %p337 = scmp.eq.s32.totalorder %s34, 0
      %p338 = por %p336, %p337
      %p339 = scmp.ne.s32.totalorder %s325, %s326
      %p340 = scmp.eq.s32.totalorder %s35, 3
      %p341 = por %p339, %p340
      %p343 = scmp.ne.s32.totalorder %s326, %s342
      %p344 = scmp.eq.s32.totalorder %s35, 0
      %p345 = por %p343, %p344
      %s346 = ssub.s32 %s37, %s44
      %p347 = scmp.eq.s32.totalorder %s346, 0
      %s349 = sadd.s32 %s348, 1
      %s350 = scalar_select %p347, %s348, %s349
      %p353 = pneg %p347
      %p354 = scmp.eq.s32.totalorder %s29, 3
      %p355 = por %p353, %p354
      %p356 = scmp.ne.s32.totalorder %s348, %s351
      %p357 = scmp.eq.s32.totalorder %s29, 0
      %p358 = por %p356, %p357
      %p359 = scmp.ne.s32.totalorder %s348, %s351
      %p360 = scmp.eq.s32.totalorder %s34, 3
      %p361 = por %p359, %p360
      %p362 = scmp.ne.s32.totalorder %s351, %s352
      %p363 = scmp.eq.s32.totalorder %s34, 0
      %p364 = por %p362, %p363
      %p365 = scmp.ne.s32.totalorder %s351, %s352
      %p366 = scmp.eq.s32.totalorder %s35, 3
      %p367 = por %p365, %p366
      %p369 = scmp.ne.s32.totalorder %s352, %s368
      %p370 = scmp.eq.s32.totalorder %s35, 0
      %p371 = por %p369, %p370
      %s372 = ssub.s32 %s37, %s44
      %p373 = scmp.eq.s32.totalorder %s372, 0
      %s375 = sadd.s32 %s374, 1
      %s376 = scalar_select %p373, %s374, %s375
      %p379 = pneg %p373
      %p380 = scmp.eq.s32.totalorder %s29, 3
      %p381 = por %p379, %p380
      %p382 = scmp.ne.s32.totalorder %s374, %s377
      %p383 = scmp.eq.s32.totalorder %s29, 0
      %p384 = por %p382, %p383
      %p385 = scmp.ne.s32.totalorder %s374, %s377
      %p386 = scmp.eq.s32.totalorder %s34, 3
      %p387 = por %p385, %p386
      %p388 = scmp.ne.s32.totalorder %s377, %s378
      %p389 = scmp.eq.s32.totalorder %s34, 0
      %p390 = por %p388, %p389
      %p391 = scmp.ne.s32.totalorder %s377, %s378
      %p392 = scmp.eq.s32.totalorder %s35, 3
      %p393 = por %p391, %p392
      %p395 = scmp.ne.s32.totalorder %s378, %s394
      %p396 = scmp.eq.s32.totalorder %s35, 0
      %p397 = por %p395, %p396
      %s398 = ssub.s32 %s37, %s44
      %p399 = scmp.eq.s32.totalorder %s398, 0
      %s401 = sadd.s32 %s400, 1
      %s402 = scalar_select %p399, %s400, %s401
      %p405 = pneg %p399
      %p406 = scmp.eq.s32.totalorder %s29, 3
      %p407 = por %p405, %p406
      %p408 = scmp.ne.s32.totalorder %s400, %s403
      %p409 = scmp.eq.s32.totalorder %s29, 0
      %p410 = por %p408, %p409
      %p411 = scmp.ne.s32.totalorder %s400, %s403
      %p412 = scmp.eq.s32.totalorder %s34, 3
      %p413 = por %p411, %p412
      %p414 = scmp.ne.s32.totalorder %s403, %s404
      %p415 = scmp.eq.s32.totalorder %s34, 0
      %p416 = por %p414, %p415
      %p417 = scmp.ne.s32.totalorder %s403, %s404
      %p418 = scmp.eq.s32.totalorder %s35, 3
      %p419 = por %p417, %p418
      %p421 = scmp.ne.s32.totalorder %s404, %s420
      %p422 = scmp.eq.s32.totalorder %s35, 0
      %p423 = por %p421, %p422
      %s424 = ssub.s32 %s37, %s44
      %p425 = scmp.eq.s32.totalorder %s424, 0
      %s427 = sadd.s32 %s426, 1
      %s428 = scalar_select %p425, %s426, %s427
      %p431 = pneg %p425
      %p432 = scmp.eq.s32.totalorder %s29, 3
      %p433 = por %p431, %p432
      %p434 = scmp.ne.s32.totalorder %s426, %s429
      %p435 = scmp.eq.s32.totalorder %s29, 0
      %p436 = por %p434, %p435
      %p437 = scmp.ne.s32.totalorder %s426, %s429
      %p438 = scmp.eq.s32.totalorder %s34, 3
      %p439 = por %p437, %p438
      %p440 = scmp.ne.s32.totalorder %s429, %s430
      %p441 = scmp.eq.s32.totalorder %s34, 0
      %p442 = por %p440, %p441
      %p443 = scmp.ne.s32.totalorder %s429, %s430
      %p444 = scmp.eq.s32.totalorder %s35, 3
      %p445 = por %p443, %p444
      %p447 = scmp.ne.s32.totalorder %s430, %s446
      %p448 = scmp.eq.s32.totalorder %s35, 0
      %p449 = por %p447, %p448
      %s450 = ssub.s32 %s37, %s44
      %p451 = scmp.eq.s32.totalorder %s450, 0
      %s453 = sadd.s32 %s452, 1
      %s454 = scalar_select %p451, %s452, %s453
      %p457 = pneg %p451
      %p458 = scmp.eq.s32.totalorder %s29, 3
      %p459 = por %p457, %p458
      %p460 = scmp.ne.s32.totalorder %s452, %s455
      %p461 = scmp.eq.s32.totalorder %s29, 0
      %p462 = por %p460, %p461
      %p463 = scmp.ne.s32.totalorder %s452, %s455
      %p464 = scmp.eq.s32.totalorder %s34, 3
      %p465 = por %p463, %p464
      %p466 = scmp.ne.s32.totalorder %s455, %s456
      %p467 = scmp.eq.s32.totalorder %s34, 0
      %p468 = por %p466, %p467
      %p469 = scmp.ne.s32.totalorder %s455, %s456
      %p470 = scmp.eq.s32.totalorder %s35, 3
      %p471 = por %p469, %p470
      %p473 = scmp.ne.s32.totalorder %s456, %s472
      %p474 = scmp.eq.s32.totalorder %s35, 0
      %p475 = por %p473, %p474
      %s476 = ssub.s32 %s37, %s44
      %p477 = scmp.eq.s32.totalorder %s476, 0
      %s479 = sadd.s32 %s478, 1
      %s480 = scalar_select %p477, %s478, %s479
      %p483 = pneg %p477
      %p484 = scmp.eq.s32.totalorder %s29, 3
      %p485 = por %p483, %p484
      %p486 = scmp.ne.s32.totalorder %s478, %s481
      %p487 = scmp.eq.s32.totalorder %s29, 0
      %p488 = por %p486, %p487
      %p489 = scmp.ne.s32.totalorder %s478, %s481
      %p490 = scmp.eq.s32.totalorder %s34, 3
      %p491 = por %p489, %p490
      %p492 = scmp.ne.s32.totalorder %s481, %s482
      %p493 = scmp.eq.s32.totalorder %s34, 0
      %p494 = por %p492, %p493
      %p495 = scmp.ne.s32.totalorder %s481, %s482
      %p496 = scmp.eq.s32.totalorder %s35, 3
      %p497 = por %p495, %p496
      %p499 = scmp.ne.s32.totalorder %s482, %s498
      %p500 = scmp.eq.s32.totalorder %s35, 0
      %p501 = por %p499, %p500
      %s502 = ssub.s32 %s36, %s48
      %p503 = scmp.eq.s32.totalorder %s502, 0
      %s505 = sadd.s32 %s504, 1
      %s506 = scalar_select %p503, %s504, %s505
      %p509 = pneg %p503
      %p510 = scmp.eq.s32.totalorder %s29, 3
      %p511 = por %p509, %p510
      %p512 = scmp.ne.s32.totalorder %s504, %s507
      %p513 = scmp.eq.s32.totalorder %s29, 0
      %p514 = por %p512, %p513
      %p515 = scmp.ne.s32.totalorder %s504, %s507
      %p516 = scmp.eq.s32.totalorder %s34, 3
      %p517 = por %p515, %p516
      %p518 = scmp.ne.s32.totalorder %s507, %s508
      %p519 = scmp.eq.s32.totalorder %s34, 0
      %p520 = por %p518, %p519
      %p521 = scmp.ne.s32.totalorder %s507, %s508
      %p522 = scmp.eq.s32.totalorder %s35, 3
      %p523 = por %p521, %p522
      %p525 = scmp.ne.s32.totalorder %s508, %s524
      %p526 = scmp.eq.s32.totalorder %s35, 0
      %p527 = por %p525, %p526
      %p528 = scmp.le.s32.totalorder 1, %s29
      %p529 = scmp.lt.s32.totalorder %s29, 5
      %p530 = pnand %p528, %p529
      %p531 = pneg %p530
      // Predicated region
      $region9: #{tpu_custom_call.1} parent=5 // pred_check
        _
      $region10: #{tpu_custom_call.1} parent=5 // pred_check_branch
        %533 = sbr.rel (%p530) target = $region12
      $region11: #{tpu_custom_call.1} parent=5 // pred_region
        %s534 = ssub.s32 %s29, 1
        // Predicated region
        $region13: #{tpu_custom_call.1} parent=11 // pred_check
          %p535 = pneg %p88
        $region14: #{tpu_custom_call.1} parent=11 // pred_check_branch
          %537 = sbr.rel (%p535) target = $region16
        $region15: #{tpu_custom_call.1} parent=11 // pred_region
          %s539 = ssub.s32 64, 64
          %540 = vsyncadd [#allocation4], %s539
          %s542 = sshll.u32 [#allocation3], 4
          %s543 = int_to_ptr.vmem [resolvable:$true] %s542
          %545 = dma.hbm_to_vmem [thread:$0]  %s1, 64, %s543, [#allocation4]
        $region16: #{tpu_custom_call.1} parent=11 // pred_fallthru
          _
        // Predicated region
        $region17: #{tpu_custom_call.1} parent=11 // pred_check
          %p546 = pneg %p135
        $region18: #{tpu_custom_call.1} parent=11 // pred_check_branch
          %548 = sbr.rel (%p546) target = $region20
        $region19: #{tpu_custom_call.1} parent=11 // pred_region
          _
        $region20: #{tpu_custom_call.1} parent=11 // pred_fallthru
          _
        // Predicated region
        $region21: #{tpu_custom_call.1} parent=11 // pred_check
          %p549 = pneg %p156
        $region22: #{tpu_custom_call.1} parent=11 // pred_check_branch
          %551 = sbr.rel (%p549) target = $region24
        $region23: #{tpu_custom_call.1} parent=11 // pred_region
          %s553 = ssub.s32 16, 16
          %554 = vsyncadd [#allocation7], %s553
          %s556 = sshll.u32 [#allocation6], 4
          %s557 = int_to_ptr.vmem [resolvable:$true] %s556
          %559 = dma.hbm_to_vmem [thread:$0]  %s4, 16, %s557, [#allocation7]
        $region24: #{tpu_custom_call.1} parent=11 // pred_fallthru
          _
      $region12: #{tpu_custom_call.1} parent=5 // pred_fallthru
        _
      %p560 = scmp.lt.s32.totalorder %s29, 4
      // Predicated region
      $region25: #{tpu_custom_call.1} parent=5 // pred_check
        %p561 = pneg %p560
      $region26: #{tpu_custom_call.1} parent=5 // pred_check_branch
        %563 = sbr.rel (%p561) target = $region28
      $region27: #{tpu_custom_call.1} parent=5 // pred_region
        // Predicated region
        $region29: #{tpu_custom_call.1} parent=27 // pred_check
          %p564 = pneg %p61
        $region30: #{tpu_custom_call.1} parent=27 // pred_check_branch
          %566 = sbr.rel (%p564) target = $region32
        $region31: #{tpu_custom_call.1} parent=27 // pred_region
          %p567 = scmp.lt.s32.totalorder %s36, 1
          %s568 = scalar_select %p567, %s36, 1
          %s569 = smul.addr %s568, 4
          %s570 = scalar_lea.vmem %s0, %s569
        $region32: #{tpu_custom_call.1} parent=27 // pred_fallthru
          _
        // Predicated region
        $region33: #{tpu_custom_call.1} parent=27 // pred_check
          %p571 = pneg %p108
        $region34: #{tpu_custom_call.1} parent=27 // pred_check_branch
          %573 = sbr.rel (%p571) target = $region36
        $region35: #{tpu_custom_call.1} parent=27 // pred_region
          %p574 = scmp.lt.s32.totalorder %s36, 1
          %s575 = scalar_select %p574, %s36, 1
          %s576 = smul.addr %s575, 4
          %s577 = scalar_lea.vmem %s2, %s576
        $region36: #{tpu_custom_call.1} parent=27 // pred_fallthru
          _
        // Predicated region
        $region37: #{tpu_custom_call.1} parent=27 // pred_check
          %p578 = pneg %p176
        $region38: #{tpu_custom_call.1} parent=27 // pred_check_branch
          %580 = sbr.rel (%p578) target = $region40
        $region39: #{tpu_custom_call.1} parent=27 // pred_region
          %s581 = sand.u32 %s29, 1
          %s582 = scalar_lea.sflag [#allocation4], %s581
          %s583 = sand.u32 %s166, 1
          %s584 = scalar_lea.vmem [#allocation8], %s583
          %s586 = ssub.s32 16, 16
          %587 = vsyncadd %s582, %s586
          %s588 = smul.addr %s36, 16
          %s589 = scalar_lea.hbm %s5, %s588
          %s591 = sshll.u32 %s584, 4
          %s592 = int_to_ptr.vmem [resolvable:$true] %s591
          %594 = dma.hbm_to_vmem [thread:$0]  %s589, 16, %s592, %s582
        $region40: #{tpu_custom_call.1} parent=27 // pred_fallthru
          _
        // Predicated region
        $region41: #{tpu_custom_call.1} parent=27 // pred_check
          %p595 = pneg %p202
        $region42: #{tpu_custom_call.1} parent=27 // pred_check_branch
          %597 = sbr.rel (%p595) target = $region44
        $region43: #{tpu_custom_call.1} parent=27 // pred_region
          %p598 = scmp.lt.s32.totalorder %s37, 1
          %s599 = scalar_select %p598, %s37, 1
          %s600 = smul.addr %s599, 4
          %s601 = smul.addr %s600, 4
          %s602 = scalar_lea.vmem %s6, %s601
        $region44: #{tpu_custom_call.1} parent=27 // pred_fallthru
          _
        // Predicated region
        $region45: #{tpu_custom_call.1} parent=27 // pred_check
          %p603 = pneg %p228
        $region46: #{tpu_custom_call.1} parent=27 // pred_check_branch
          %605 = sbr.rel (%p603) target = $region48
        $region47: #{tpu_custom_call.1} parent=27 // pred_region
          %p606 = scmp.lt.s32.totalorder %s37, 1
          %s607 = scalar_select %p606, %s37, 1
          %s608 = scalar_lea.vmem %s7, %s607
        $region48: #{tpu_custom_call.1} parent=27 // pred_fallthru
          _
        // Predicated region
        $region49: #{tpu_custom_call.1} parent=27 // pred_check
          %p609 = pneg %p254
        $region50: #{tpu_custom_call.1} parent=27 // pred_check_branch
          %611 = sbr.rel (%p609) target = $region52
        $region51: #{tpu_custom_call.1} parent=27 // pred_region
          %p612 = scmp.lt.s32.totalorder %s37, 1
          %s613 = scalar_select %p612, %s37, 1
          %s614 = smul.addr %s613, 4
          %s615 = smul.addr %s614, 4
          %s616 = scalar_lea.vmem %s8, %s615
        $region52: #{tpu_custom_call.1} parent=27 // pred_fallthru
          _
        // Predicated region
        $region53: #{tpu_custom_call.1} parent=27 // pred_check
          %p617 = pneg %p280
        $region54: #{tpu_custom_call.1} parent=27 // pred_check_branch
          %619 = sbr.rel (%p617) target = $region56
        $region55: #{tpu_custom_call.1} parent=27 // pred_region
          %p620 = scmp.lt.s32.totalorder %s37, 1
          %s621 = scalar_select %p620, %s37, 1
          %s622 = scalar_lea.vmem %s9, %s621
        $region56: #{tpu_custom_call.1} parent=27 // pred_fallthru
          _
        // Predicated region
        $region57: #{tpu_custom_call.1} parent=27 // pred_check
          %p623 = pneg %p306
        $region58: #{tpu_custom_call.1} parent=27 // pred_check_branch
          %625 = sbr.rel (%p623) target = $region60
        $region59: #{tpu_custom_call.1} parent=27 // pred_region
          %p626 = scmp.lt.s32.totalorder %s37, 1
          %s627 = scalar_select %p626, %s37, 1
          %s628 = scalar_lea.vmem %s10, %s627
        $region60: #{tpu_custom_call.1} parent=27 // pred_fallthru
          _
        // Predicated region
        $region61: #{tpu_custom_call.1} parent=27 // pred_check
          %p629 = pneg %p332
        $region62: #{tpu_custom_call.1} parent=27 // pred_check_branch
          %631 = sbr.rel (%p629) target = $region64
        $region63: #{tpu_custom_call.1} parent=27 // pred_region
          %p632 = scmp.lt.s32.totalorder %s37, 1
          %s633 = scalar_select %p632, %s37, 1
          %s634 = scalar_lea.vmem %s11, %s633
        $region64: #{tpu_custom_call.1} parent=27 // pred_fallthru
          _
        // Predicated region
        $region65: #{tpu_custom_call.1} parent=27 // pred_check
          %p635 = pneg %p358
        $region66: #{tpu_custom_call.1} parent=27 // pred_check_branch
          %637 = sbr.rel (%p635) target = $region68
        $region67: #{tpu_custom_call.1} parent=27 // pred_region
          %p638 = scmp.lt.s32.totalorder %s37, 1
          %s639 = scalar_select %p638, %s37, 1
          %s640 = smul.addr %s639, 4
          %s641 = smul.addr %s640, 4
          %s642 = scalar_lea.vmem %s12, %s641
        $region68: #{tpu_custom_call.1} parent=27 // pred_fallthru
          _
        // Predicated region
        $region69: #{tpu_custom_call.1} parent=27 // pred_check
          %p643 = pneg %p384
        $region70: #{tpu_custom_call.1} parent=27 // pred_check_branch
          %645 = sbr.rel (%p643) target = $region72
        $region71: #{tpu_custom_call.1} parent=27 // pred_region
          %p646 = scmp.lt.s32.totalorder %s37, 1
          %s647 = scalar_select %p646, %s37, 1
          %s648 = scalar_lea.vmem %s13, %s647
        $region72: #{tpu_custom_call.1} parent=27 // pred_fallthru
          _
        // Predicated region
        $region73: #{tpu_custom_call.1} parent=27 // pred_check
          %p649 = pneg %p410
        $region74: #{tpu_custom_call.1} parent=27 // pred_check_branch
          %651 = sbr.rel (%p649) target = $region76
        $region75: #{tpu_custom_call.1} parent=27 // pred_region
          %p652 = scmp.lt.s32.totalorder %s37, 1
          %s653 = scalar_select %p652, %s37, 1
          %s654 = smul.addr %s653, 8
          %s655 = smul.addr %s654, 4
          %s656 = scalar_lea.vmem %s14, %s655
        $region76: #{tpu_custom_call.1} parent=27 // pred_fallthru
          _
        // Predicated region
        $region77: #{tpu_custom_call.1} parent=27 // pred_check
          %p657 = pneg %p436
        $region78: #{tpu_custom_call.1} parent=27 // pred_check_branch
          %659 = sbr.rel (%p657) target = $region80
        $region79: #{tpu_custom_call.1} parent=27 // pred_region
          %p660 = scmp.lt.s32.totalorder %s37, 1
          %s661 = scalar_select %p660, %s37, 1
          %s662 = scalar_lea.vmem %s15, %s661
        $region80: #{tpu_custom_call.1} parent=27 // pred_fallthru
          _
        // Predicated region
        $region81: #{tpu_custom_call.1} parent=27 // pred_check
          %p663 = pneg %p462
        $region82: #{tpu_custom_call.1} parent=27 // pred_check_branch
          %665 = sbr.rel (%p663) target = $region84
        $region83: #{tpu_custom_call.1} parent=27 // pred_region
          %p666 = scmp.lt.s32.totalorder %s37, 1
          %s667 = scalar_select %p666, %s37, 1
          %s668 = scalar_lea.vmem %s16, %s667
        $region84: #{tpu_custom_call.1} parent=27 // pred_fallthru
          _
        // Predicated region
        $region85: #{tpu_custom_call.1} parent=27 // pred_check
          %p669 = pneg %p488
        $region86: #{tpu_custom_call.1} parent=27 // pred_check_branch
          %671 = sbr.rel (%p669) target = $region88
        $region87: #{tpu_custom_call.1} parent=27 // pred_region
          %p672 = scmp.lt.s32.totalorder %s37, 1
          %s673 = scalar_select %p672, %s37, 1
          %s674 = scalar_lea.vmem %s17, %s673
        $region88: #{tpu_custom_call.1} parent=27 // pred_fallthru
          _
      $region28: #{tpu_custom_call.1} parent=5 // pred_fallthru
        _
      %p675 = scmp.le.s32.totalorder 1, %s29
      %p676 = scmp.lt.s32.totalorder %s29, 5
      %p677 = pnand %p675, %p676
      %p678 = pneg %p677
      // Predicated region
      $region89: #{tpu_custom_call.1} parent=5 // pred_check
        _
      $region90: #{tpu_custom_call.1} parent=5 // pred_check_branch
        %680 = sbr.rel (%p677) target = $region92
      $region91: #{tpu_custom_call.1} parent=5 // pred_region
        %s681 = ssub.s32 %s29, 1
        // Predicated region
        $region93: #{tpu_custom_call.1} parent=91 // pred_check
          %p682 = pneg %p88
        $region94: #{tpu_custom_call.1} parent=91 // pred_check_branch
          %684 = sbr.rel (%p682) target = $region96
        $region95: #{tpu_custom_call.1} parent=91 // pred_region
          %685 = dma.done [#allocation4], 64
        $region96: #{tpu_custom_call.1} parent=91 // pred_fallthru
          _
        // Predicated region
        $region97: #{tpu_custom_call.1} parent=91 // pred_check
          %p686 = pneg %p156
        $region98: #{tpu_custom_call.1} parent=91 // pred_check_branch
          %688 = sbr.rel (%p686) target = $region100
        $region99: #{tpu_custom_call.1} parent=91 // pred_region
          %689 = dma.done [#allocation7], 16
        $region100: #{tpu_custom_call.1} parent=91 // pred_fallthru
          _
        %s690 = sand.u32 %s34, 1
        %s691 = scalar_lea.sflag [#allocation4], %s690
        %s692 = sand.u32 %s169, 1
        %s693 = scalar_lea.vmem [#allocation8], %s692
        // Predicated region
        $region101: #{tpu_custom_call.1} parent=91 // pred_check
          %p694 = pneg %p182
        $region102: #{tpu_custom_call.1} parent=91 // pred_check_branch
          %696 = sbr.rel (%p694) target = $region104
        $region103: #{tpu_custom_call.1} parent=91 // pred_region
          %697 = dma.done %s691, 16
        $region104: #{tpu_custom_call.1} parent=91 // pred_fallthru
          _
        %p698 = scmp.lt.s32.totalorder %s38, 1
        %s699 = scalar_select %p698, %s38, 1
        %s700 = smul.addr %s699, 4
        %s701 = scalar_lea.vmem %s0, %s700
        %p702 = pneg %p67
        %p703 = pneg %p64
        %p704 = pneg %p88
        %p705 = pneg %p85
        %p706 = scmp.lt.s32.totalorder %s38, 1
        %s707 = scalar_select %p706, %s38, 1
        %s708 = smul.addr %s707, 4
        %s709 = scalar_lea.vmem %s2, %s708
        %p710 = pneg %p114
        %p711 = pneg %p111
        %p712 = pneg %p135
        %p713 = pneg %p132
        %p714 = pneg %p156
        %p715 = pneg %p153
        %s716 = sand.u32 %s34, 1
        %s717 = scalar_lea.sflag [#allocation4], %s716
        %s718 = sand.u32 %s169, 1
        %s719 = scalar_lea.vmem [#allocation8], %s718
        %p720 = pneg %p182
        %p721 = pneg %p179
        %p722 = scmp.lt.s32.totalorder %s39, 1
        %s723 = scalar_select %p722, %s39, 1
        %s724 = smul.addr %s723, 4
        %s725 = smul.addr %s724, 4
        %s726 = scalar_lea.vmem %s6, %s725
        %p727 = pneg %p208
        %p728 = pneg %p205
        %p729 = scmp.lt.s32.totalorder %s39, 1
        %s730 = scalar_select %p729, %s39, 1
        %s731 = scalar_lea.vmem %s7, %s730
        %p732 = pneg %p234
        %p733 = pneg %p231
        %p734 = scmp.lt.s32.totalorder %s39, 1
        %s735 = scalar_select %p734, %s39, 1
        %s736 = smul.addr %s735, 4
        %s737 = smul.addr %s736, 4
        %s738 = scalar_lea.vmem %s8, %s737
        %p739 = pneg %p260
        %p740 = pneg %p257
        %p741 = scmp.lt.s32.totalorder %s39, 1
        %s742 = scalar_select %p741, %s39, 1
        %s743 = scalar_lea.vmem %s9, %s742
        %p744 = pneg %p286
        %p745 = pneg %p283
        %p746 = scmp.lt.s32.totalorder %s39, 1
        %s747 = scalar_select %p746, %s39, 1
        %s748 = scalar_lea.vmem %s10, %s747
        %p749 = pneg %p312
        %p750 = pneg %p309
        %p751 = scmp.lt.s32.totalorder %s39, 1
        %s752 = scalar_select %p751, %s39, 1
        %s753 = scalar_lea.vmem %s11, %s752
        %p754 = pneg %p338
        %p755 = pneg %p335
        %p756 = scmp.lt.s32.totalorder %s39, 1
        %s757 = scalar_select %p756, %s39, 1
        %s758 = smul.addr %s757, 4
        %s759 = smul.addr %s758, 4
        %s760 = scalar_lea.vmem %s12, %s759
        %p761 = pneg %p364
        %p762 = pneg %p361
        %p763 = scmp.lt.s32.totalorder %s39, 1
        %s764 = scalar_select %p763, %s39, 1
        %s765 = scalar_lea.vmem %s13, %s764
        %p766 = pneg %p390
        %p767 = pneg %p387
        %p768 = scmp.lt.s32.totalorder %s39, 1
        %s769 = scalar_select %p768, %s39, 1
        %s770 = smul.addr %s769, 8
        %s771 = smul.addr %s770, 4
        %s772 = scalar_lea.vmem %s14, %s771
        %p773 = pneg %p416
        %p774 = pneg %p413
        %p775 = scmp.lt.s32.totalorder %s39, 1
        %s776 = scalar_select %p775, %s39, 1
        %s777 = scalar_lea.vmem %s15, %s776
        %p778 = pneg %p442
        %p779 = pneg %p439
        %p780 = scmp.lt.s32.totalorder %s39, 1
        %s781 = scalar_select %p780, %s39, 1
        %s782 = scalar_lea.vmem %s16, %s781
        %p783 = pneg %p468
        %p784 = pneg %p465
        %p785 = scmp.lt.s32.totalorder %s39, 1
        %s786 = scalar_select %p785, %s39, 1
        %s787 = scalar_lea.vmem %s17, %s786
        %p788 = pneg %p494
        %p789 = pneg %p491
        %p790 = pneg %p520
        %p791 = pneg %p517
        %s792 = sand.u32 %s507, 1
        %s793 = scalar_lea.sflag [#allocation5], %s792
        %s794 = sand.u32 %s507, 1
        %s795 = smul.addr %s794, 4
        %s796 = scalar_lea.vmem [#allocation9], %s795
        %p797 = scmp.lt.s32.totalorder %s38, 1
        %s798 = scalar_select %p797, %s38, 1
        %s799 = smul.addr %s798, 4
        %s800 = scalar_lea.vmem %s0, %s799
        %p801 = scmp.lt.s32.totalorder %s38, 1
        %s802 = scalar_select %p801, %s38, 1
        %s803 = smul.addr %s802, 4
        %s804 = scalar_lea.vmem %s2, %s803
        %p805 = scmp.lt.s32.totalorder %s39, 1
        %s806 = scalar_select %p805, %s39, 1
        %s807 = smul.addr %s806, 4
        %s808 = smul.addr %s807, 4
        %s809 = scalar_lea.vmem %s6, %s808
        %p810 = scmp.lt.s32.totalorder %s39, 1
        %s811 = scalar_select %p810, %s39, 1
        %s812 = scalar_lea.vmem %s7, %s811
        %p813 = scmp.lt.s32.totalorder %s39, 1
        %s814 = scalar_select %p813, %s39, 1
        %s815 = smul.addr %s814, 4
        %s816 = smul.addr %s815, 4
        %s817 = scalar_lea.vmem %s8, %s816
        %p818 = scmp.lt.s32.totalorder %s39, 1
        %s819 = scalar_select %p818, %s39, 1
        %s820 = scalar_lea.vmem %s9, %s819
        %p821 = scmp.lt.s32.totalorder %s39, 1
        %s822 = scalar_select %p821, %s39, 1
        %s823 = scalar_lea.vmem %s10, %s822
        %p824 = scmp.lt.s32.totalorder %s39, 1
        %s825 = scalar_select %p824, %s39, 1
        %s826 = scalar_lea.vmem %s11, %s825
        %p827 = scmp.lt.s32.totalorder %s39, 1
        %s828 = scalar_select %p827, %s39, 1
        %s829 = smul.addr %s828, 4
        %s830 = smul.addr %s829, 4
        %s831 = scalar_lea.vmem %s12, %s830
        %p832 = scmp.lt.s32.totalorder %s39, 1
        %s833 = scalar_select %p832, %s39, 1
        %s834 = scalar_lea.vmem %s13, %s833
        %p835 = scmp.lt.s32.totalorder %s39, 1
        %s836 = scalar_select %p835, %s39, 1
        %s837 = smul.addr %s836, 8
        %s838 = smul.addr %s837, 4
        %s839 = scalar_lea.vmem %s14, %s838
        %p840 = scmp.lt.s32.totalorder %s39, 1
        %s841 = scalar_select %p840, %s39, 1
        %s842 = scalar_lea.vmem %s15, %s841
        %p843 = scmp.lt.s32.totalorder %s39, 1
        %s844 = scalar_select %p843, %s39, 1
        %s845 = scalar_lea.vmem %s16, %s844
        %p846 = scmp.lt.s32.totalorder %s39, 1
        %s847 = scalar_select %p846, %s39, 1
        %s848 = scalar_lea.vmem %s17, %s847
        %p850 = scmp.eq.s32.totalorder %s39, 0
        // Predicated region
        $region105: #{tpu_custom_call.1} parent=91 // pred_check
          %p851 = pneg %p850
        $region106: #{tpu_custom_call.1} parent=91 // pred_check_branch
          %853 = sbr.rel (%p851) target = $region108
        $region107: #{tpu_custom_call.1} parent=91 // pred_region
          %v854 = vld [vmem:[%s800] sm:$0xf]
          %v855 = vunpack.c.l.bf16 %v854
          %v856 = vld [vmem:[#allocation3] sm:$0xf]
          %v857 = vunpack.c.l.bf16 %v856
          %v858 = vadd.f32 %v855, %v857
          %v859 = vld [vmem:[%s804] sm:$0xf]
          %v860 = vunpack.c.l.bf16 %v859
          %v861 = vadd.f32 %v858, %v860
          %v862 = vld [vmem:[%s3] sm:$0x1]
          %v863 = vunpack.c.l.bf16 %v862
          %v864 = vld [vmem:[#allocation6] sm:$0x1]
          %v865 = vunpack.c.l.bf16 %v864
          %vm866 = vcmask 261120
          %v867 = vsel %vm866, %v861, 0.0
          %868 = vadd.xlane.f32.xlu0 %v867
          %v869 = vpop.xlane.xlu0 %868
          %v870 = vrcp.pop 32.0
          %v871 = vmul.f32 %v869, %v870
          %v872 = vsub.f32 %v861, %v871
          %v873 = vmul.f32 %v872, %v872
          %v874 = vsel %vm866, %v873, 0.0
          %875 = vadd.xlane.f32.xlu0 %v874
          %v876 = vpop.xlane.xlu0 %875
          %v877 = vmul.f32 %v876, %v870
          %v878 = vadd.f32 %v877, 1e-12
          %v879 = vrsqrt.pop %v878
          %v880 = vmul.f32 %v872, %v879
          %v881 = vlaneseq
          %v882 = vshrl.u32 %v881, 7
          %v883 = vsub.s32 0, %v882
          %v884 = vrot.slane %v863, %v883
          %v885 = vmul.f32 %v880, %v884
          %v886 = vlaneseq
          %v887 = vshrl.u32 %v886, 7
          %v888 = vsub.s32 0, %v887
          %v889 = vrot.slane %v865, %v888
          %v890 = vadd.f32 %v885, %v889
          %891 = vst.msk [vmem:[#allocation2] sm:$0xff] %vm866, %v890
        $region108: #{tpu_custom_call.1} parent=91 // pred_fallthru
          _
        %v892 = vld [vmem:[#allocation2] sm:$0xff]
        %v893 = vpack.c.bf16 %v892, %v892
        %v894 = vld [vmem:[%s809] sm:$0xf]
        %v895 = vld [vmem:[%s809 + $0x4] sm:$0xf]
        %v896 = vld [vmem:[%s809 + $0x8] sm:$0xf]
        %v897 = vld [vmem:[%s809 + $0xc] sm:$0xf]
        %v898 = vld [vmem:[%s812] sm:$0x1]
        %v899 = vunpack.c.l.bf16 %v898
        %v900 = vlaneseq
        %v901 = vshrl.u32 %v900, 7
        %v902 = vsub.s32 0, %v901
        %v903 = vrot.slane %v899, %v902
        %v908 = vunpack.c.l.b16 %v894
        %v909 = vunpack.c.l.b16 %v895
        %v910 = vunpack.c.l.b16 %v896
        %v911 = vunpack.c.l.b16 %v897
        %v912 = vpack.c.b16 %v909, %v908
        %v913 = vpack.c.b16 %v911, %v910
        %vm916 = vcmask 261120
        %v918 = vsel %vm916, %v893, 0
        %920 = vmatprep.subr.bf16.mxu0 0
        %921 = vmatpush1.bf16.msra.mxu0 0
        %922 = vmatprep.subr.bf16.mxu0 0
        %923 = vmatpush1.bf16.msra.mxu0 0
        %924 = vmatprep.subr.bf16.mxu0 0
        %925 = vmatpush1.bf16.msra.mxu0 0
        %926 = vmatprep.subr.bf16.mxu0 0
        %927 = vmatpush1.bf16.msra.mxu0 0
        %928 = vmatprep.subr.bf16.mxu0 0
        %929 = vmatpush1.bf16.msra.mxu0 0
        %930 = vmatprep.subr.bf16.mxu0 0
        %931 = vmatpush1.bf16.msra.mxu0 0
        %932 = vmatprep.subr.bf16.mxu0 0
        %933 = vmatpush1.bf16.msra.mxu0 %v913
        %934 = vmatprep.subr.bf16.mxu0 0
        %935 = vmatpush1.bf16.msra.mxu0 %v912
        %936 = vmatprep.subr.bf16.mxu0 0
        %937 = vmatpush2.bf16.msra.mxu0 0
        %938 = vmatprep.subr.bf16.mxu0 0
        %939 = vmatpush2.bf16.msra.mxu0 0
        %940 = vmatprep.subr.bf16.mxu0 0
        %941 = vmatpush2.bf16.msra.mxu0 0
        %942 = vmatprep.subr.bf16.mxu0 0
        %943 = vmatpush2.bf16.msra.mxu0 0
        %944 = vmatprep.subr.bf16.mxu0 0
        %945 = vmatpush2.bf16.msra.mxu0 0
        %946 = vmatprep.subr.bf16.mxu0 0
        %947 = vmatpush2.bf16.msra.mxu0 0
        %948 = vmatprep.subr.bf16.mxu0 0
        %949 = vmatpush2.bf16.msra.mxu0 0
        %950 = vmatprep.subr.bf16.mxu0 0
        %951 = vmatpush2.bf16.msra.mxu0 0
        %952 = vmatprep.mubr.bf16.mxu0 0
        %953 = vmatmul.mubr.bf16.gmra.mxu0 %v918
        %v954 = vpop.f32.mrf.mxu0
        %v955 = vadd.f32 %v903, %v954
        %v956 = vpop.f32.mrf.mxu0
        %v957 = vpop.f32.mrf.mxu0
        %v958 = vpop.f32.mrf.mxu0
        %959 = vdwg.mxu0
        %961 = vrot.lane.b32.xlu0 %v955, 112
        %v962 = vpop.permute.xlu0 %961
        %963 = vrot.lane.b32.xlu0 %v955, 96
        %v964 = vpop.permute.xlu0 %963
        %vm965 = vcmask 130048
        %v966 = vsel %vm965, %v955, 0
        %v968 = vsel %vm965, %v964, 0
        %970 = vmatprep.subr.mxu0 0.0
        %971 = vmatpush1.xpose.msra.mxu0 0.0
        %972 = vmatprep.subr.mxu0 0.0
        %973 = vmatpush1.xpose.msra.mxu0 0.0
        %974 = vmatprep.subr.mxu0 0.0
        %975 = vmatpush1.xpose.msra.mxu0 0.0
        %976 = vmatprep.subr.mxu0 0.0
        %977 = vmatpush1.xpose.msra.mxu0 0.0
        %978 = vmatprep.subr.mxu0 0.0
        %979 = vmatpush1.xpose.msra.mxu0 0.0
        %980 = vmatprep.subr.mxu0 0.0
        %981 = vmatpush1.xpose.msra.mxu0 0.0
        %982 = vmatprep.subr.mxu0 0.0
        %983 = vmatpush1.xpose.msra.mxu0 0.0
        %984 = vmatprep.subr.mxu0 0.0
        %985 = vmatpush1.xpose.msra.mxu0 0.0
        %986 = vmatprep.subr.mxu0 0.0
        %987 = vmatpush1.xpose.msra.mxu0 0.0
        %988 = vmatprep.subr.mxu0 0.0
        %989 = vmatpush1.xpose.msra.mxu0 0.0
        %990 = vmatprep.subr.mxu0 0.0
        %991 = vmatpush1.xpose.msra.mxu0 0.0
        %992 = vmatprep.subr.mxu0 0.0
        %993 = vmatpush1.xpose.msra.mxu0 0.0
        %994 = vmatprep.subr.mxu0 0.0
        %995 = vmatpush1.xpose.msra.mxu0 0.0
        %996 = vmatprep.subr.mxu0 0.0
        %997 = vmatpush1.xpose.msra.mxu0 0.0
        %998 = vmatprep.subr.mxu0 0.0
        %999 = vmatpush1.xpose.msra.mxu0 0.0
        %1000 = vmatprep.subr.mxu0 0.0
        %1001 = vmatpush1.xpose.msra.mxu0 %v968
        %1002 = vmatprep.subr.mxu0 0.0
        %1003 = vmatpush2.xpose.msra.mxu0 0.0
        %1004 = vmatprep.subr.mxu0 0.0
        %1005 = vmatpush2.xpose.msra.mxu0 0.0
        %1006 = vmatprep.subr.mxu0 0.0
        %1007 = vmatpush2.xpose.msra.mxu0 0.0
        %1008 = vmatprep.subr.mxu0 0.0
        %1009 = vmatpush2.xpose.msra.mxu0 0.0
        %1010 = vmatprep.subr.mxu0 0.0
        %1011 = vmatpush2.xpose.msra.mxu0 0.0
        %1012 = vmatprep.subr.mxu0 0.0
        %1013 = vmatpush2.xpose.msra.mxu0 0.0
        %1014 = vmatprep.subr.mxu0 0.0
        %1015 = vmatpush2.xpose.msra.mxu0 0.0
        %1016 = vmatprep.subr.mxu0 0.0
        %1017 = vmatpush2.xpose.msra.mxu0 0.0
        %1018 = vmatprep.subr.mxu0 0.0
        %1019 = vmatpush2.xpose.msra.mxu0 0.0
        %1020 = vmatprep.subr.mxu0 0.0
        %1021 = vmatpush2.xpose.msra.mxu0 0.0
        %1022 = vmatprep.subr.mxu0 0.0
        %1023 = vmatpush2.xpose.msra.mxu0 0.0
        %1024 = vmatprep.subr.mxu0 0.0
        %1025 = vmatpush2.xpose.msra.mxu0 0.0
        %1026 = vmatprep.subr.mxu0 0.0
        %1027 = vmatpush2.xpose.msra.mxu0 0.0
        %1028 = vmatprep.subr.mxu0 0.0
        %1029 = vmatpush2.xpose.msra.mxu0 0.0
        %1030 = vmatprep.subr.mxu0 0.0
        %1031 = vmatpush2.xpose.msra.mxu0 0.0
        %1032 = vmatprep.subr.mxu0 0.0
        %1033 = vmatpush2.xpose.msra.mxu0 0.0
        %1034 = vmatprep.mubr.f32.mxu0 0.0
        %1035 = vmatmul.mubr.f32.gmra.mxu0 %v966
        %v1036 = vpop.f32.mrf.mxu0
        %v1037 = vadd.f32 0.0, %v1036
        %v1038 = vpop.f32.mrf.mxu0
        %1039 = vdwg.mxu0
        %1040 = vrot.lane.b32.xlu0 %v962, 96
        %v1041 = vpop.permute.xlu0 %1040
        %v1042 = vsel %vm965, %v962, 0
        %v1044 = vsel %vm965, %v1041, 0
        %1046 = vmatprep.subr.mxu0 0.0
        %1047 = vmatpush1.xpose.msra.mxu0 0.0
        %1048 = vmatprep.subr.mxu0 0.0
        %1049 = vmatpush1.xpose.msra.mxu0 0.0
        %1050 = vmatprep.subr.mxu0 0.0
        %1051 = vmatpush1.xpose.msra.mxu0 0.0
        %1052 = vmatprep.subr.mxu0 0.0
        %1053 = vmatpush1.xpose.msra.mxu0 0.0
        %1054 = vmatprep.subr.mxu0 0.0
        %1055 = vmatpush1.xpose.msra.mxu0 0.0
        %1056 = vmatprep.subr.mxu0 0.0
        %1057 = vmatpush1.xpose.msra.mxu0 0.0
        %1058 = vmatprep.subr.mxu0 0.0
        %1059 = vmatpush1.xpose.msra.mxu0 0.0
        %1060 = vmatprep.subr.mxu0 0.0
        %1061 = vmatpush1.xpose.msra.mxu0 0.0
        %1062 = vmatprep.subr.mxu0 0.0
        %1063 = vmatpush1.xpose.msra.mxu0 0.0
        %1064 = vmatprep.subr.mxu0 0.0
        %1065 = vmatpush1.xpose.msra.mxu0 0.0
        %1066 = vmatprep.subr.mxu0 0.0
        %1067 = vmatpush1.xpose.msra.mxu0 0.0
        %1068 = vmatprep.subr.mxu0 0.0
        %1069 = vmatpush1.xpose.msra.mxu0 0.0
        %1070 = vmatprep.subr.mxu0 0.0
        %1071 = vmatpush1.xpose.msra.mxu0 0.0
        %1072 = vmatprep.subr.mxu0 0.0
        %1073 = vmatpush1.xpose.msra.mxu0 0.0
        %1074 = vmatprep.subr.mxu0 0.0
        %1075 = vmatpush1.xpose.msra.mxu0 0.0
        %1076 = vmatprep.subr.mxu0 0.0
        %1077 = vmatpush1.xpose.msra.mxu0 %v1044
        %1078 = vmatprep.subr.mxu0 0.0
        %1079 = vmatpush2.xpose.msra.mxu0 0.0
        %1080 = vmatprep.subr.mxu0 0.0
        %1081 = vmatpush2.xpose.msra.mxu0 0.0
        %1082 = vmatprep.subr.mxu0 0.0
        %1083 = vmatpush2.xpose.msra.mxu0 0.0
        %1084 = vmatprep.subr.mxu0 0.0
        %1085 = vmatpush2.xpose.msra.mxu0 0.0
        %1086 = vmatprep.subr.mxu0 0.0
        %1087 = vmatpush2.xpose.msra.mxu0 0.0
        %1088 = vmatprep.subr.mxu0 0.0
        %1089 = vmatpush2.xpose.msra.mxu0 0.0
        %1090 = vmatprep.subr.mxu0 0.0
        %1091 = vmatpush2.xpose.msra.mxu0 0.0
        %1092 = vmatprep.subr.mxu0 0.0
        %1093 = vmatpush2.xpose.msra.mxu0 0.0
        %1094 = vmatprep.subr.mxu0 0.0
        %1095 = vmatpush2.xpose.msra.mxu0 0.0
        %1096 = vmatprep.subr.mxu0 0.0
        %1097 = vmatpush2.xpose.msra.mxu0 0.0
        %1098 = vmatprep.subr.mxu0 0.0
        %1099 = vmatpush2.xpose.msra.mxu0 0.0
        %1100 = vmatprep.subr.mxu0 0.0
        %1101 = vmatpush2.xpose.msra.mxu0 0.0
        %1102 = vmatprep.subr.mxu0 0.0
        %1103 = vmatpush2.xpose.msra.mxu0 0.0
        %1104 = vmatprep.subr.mxu0 0.0
        %1105 = vmatpush2.xpose.msra.mxu0 0.0
        %1106 = vmatprep.subr.mxu0 0.0
        %1107 = vmatpush2.xpose.msra.mxu0 0.0
        %1108 = vmatprep.subr.mxu0 0.0
        %1109 = vmatpush2.xpose.msra.mxu0 0.0
        %1110 = vmatprep.mubr.f32.mxu0 0.0
        %1111 = vmatmul.mubr.f32.gmra.mxu0 %v1042
        %v1112 = vpop.f32.mrf.mxu0
        %v1113 = vadd.f32 0.0, %v1112
        %v1114 = vpop.f32.mrf.mxu0
        %1115 = vdwg.mxu0
        %v1116 = vmul.f32 %v1037, 0.25
        %v1117 = vmul.f32 %v1113, 0.25
        %v1118 = vld [vmem:[%s693] sm:$0x1]
        %v1120 = vlaneseq
        %v1121 = vshrl.u32 %v1120, 7
        %v1122 = vsub.s32 0, %v1121
        %v1123 = vrot.slane %v1118, %v1122
        %v1125 = vadd.f32 %v1116, %v1123
        %v1126 = vadd.f32 %v1117, %v1123
        %vm1127 = vcmask 64512
        %v1128 = vsel %vm1127, %v1125, -inf
        %1129 = vmax.xlane.f32.xlu0 %v1128
        %v1130 = vpop.xlane.xlu0 %1129
        %v1131 = vsel %vm1127, %v1126, -inf
        %1132 = vmax.xlane.f32.xlu0 %v1131
        %v1133 = vpop.xlane.xlu0 %1132
        %v1134 = vsub.f32 %v1125, %v1130
        %v1135 = vsub.f32 %v1126, %v1133
        %v1136 = vmul.f32 %v1134, 1.442695
        %v1137 = vpow.pop %v1136
        %v1138 = vmul.f32 %v1135, 1.442695
        %v1139 = vpow.pop %v1138
        %v1140 = vsel %vm1127, %v1137, 0.0
        %1141 = vadd.xlane.f32.xlu0 %v1140
        %v1142 = vpop.xlane.xlu0 %1141
        %v1143 = vsel %vm1127, %v1139, 0.0
        %1144 = vadd.xlane.f32.xlu0 %v1143
        %v1145 = vpop.xlane.xlu0 %1144
        %v1146 = vrcp.pop %v1142
        %v1147 = vrcp.pop %v1145
        %v1148 = vmul.f32 %v1137, %v1146
        %v1149 = vmul.f32 %v1139, %v1147
        %1150 = vrot.lane.b32.xlu0 %v955, 64
        %v1151 = vpop.permute.xlu0 %1150
        %v1154 = vsel %vm1127, %v1148, 0
        %1156 = vmatprep.subr.mxu0 0.0
        %1157 = vmatpush1.msra.mxu0 0.0
        %1158 = vmatprep.subr.mxu0 0.0
        %1159 = vmatpush1.msra.mxu0 0.0
        %1160 = vmatprep.subr.mxu0 0.0
        %1161 = vmatpush1.msra.mxu0 0.0
        %1162 = vmatprep.subr.mxu0 0.0
        %1163 = vmatpush1.msra.mxu0 0.0
        %1164 = vmatprep.subr.mxu0 0.0
        %1165 = vmatpush1.msra.mxu0 0.0
        %1166 = vmatprep.subr.mxu0 0.0
        %1167 = vmatpush1.msra.mxu0 0.0
        %1168 = vmatprep.subr.mxu0 0.0
        %1169 = vmatpush1.msra.mxu0 0.0
        %1170 = vmatprep.subr.mxu0 0.0
        %1171 = vmatpush1.msra.mxu0 0.0
        %1172 = vmatprep.subr.mxu0 0.0
        %1173 = vmatpush1.msra.mxu0 0.0
        %1174 = vmatprep.subr.mxu0 0.0
        %1175 = vmatpush1.msra.mxu0 0.0
        %1176 = vmatprep.subr.mxu0 0.0
        %1177 = vmatpush1.msra.mxu0 0.0
        %1178 = vmatprep.subr.mxu0 0.0
        %1179 = vmatpush1.msra.mxu0 0.0
        %1180 = vmatprep.subr.mxu0 0.0
        %1181 = vmatpush1.msra.mxu0 0.0
        %1182 = vmatprep.subr.mxu0 0.0
        %1183 = vmatpush1.msra.mxu0 0.0
        %1184 = vmatprep.subr.mxu0 0.0
        %1185 = vmatpush1.msra.mxu0 0.0
        %1186 = vmatprep.subr.mxu0 0.0
        %1187 = vmatpush1.msra.mxu0 %v1151
        %1188 = vmatprep.subr.mxu0 0.0
        %1189 = vmatpush2.msra.mxu0 0.0
        %1190 = vmatprep.subr.mxu0 0.0
        %1191 = vmatpush2.msra.mxu0 0.0
        %1192 = vmatprep.subr.mxu0 0.0
        %1193 = vmatpush2.msra.mxu0 0.0
        %1194 = vmatprep.subr.mxu0 0.0
        %1195 = vmatpush2.msra.mxu0 0.0
        %1196 = vmatprep.subr.mxu0 0.0
        %1197 = vmatpush2.msra.mxu0 0.0
        %1198 = vmatprep.subr.mxu0 0.0
        %1199 = vmatpush2.msra.mxu0 0.0
        %1200 = vmatprep.subr.mxu0 0.0
        %1201 = vmatpush2.msra.mxu0 0.0
        %1202 = vmatprep.subr.mxu0 0.0
        %1203 = vmatpush2.msra.mxu0 0.0
        %1204 = vmatprep.subr.mxu0 0.0
        %1205 = vmatpush2.msra.mxu0 0.0
        %1206 = vmatprep.subr.mxu0 0.0
        %1207 = vmatpush2.msra.mxu0 0.0
        %1208 = vmatprep.subr.mxu0 0.0
        %1209 = vmatpush2.msra.mxu0 0.0
        %1210 = vmatprep.subr.mxu0 0.0
        %1211 = vmatpush2.msra.mxu0 0.0
        %1212 = vmatprep.subr.mxu0 0.0
        %1213 = vmatpush2.msra.mxu0 0.0
        %1214 = vmatprep.subr.mxu0 0.0
        %1215 = vmatpush2.msra.mxu0 0.0
        %1216 = vmatprep.subr.mxu0 0.0
        %1217 = vmatpush2.msra.mxu0 0.0
        %1218 = vmatprep.subr.mxu0 0.0
        %1219 = vmatpush2.msra.mxu0 0.0
        %1220 = vmatprep.mubr.f32.mxu0 0.0
        %1221 = vmatmul.mubr.f32.gmra.mxu0 %v1154
        %v1222 = vpop.f32.mrf.mxu0
        %v1223 = vadd.f32 0.0, %v1222
        %v1224 = vpop.f32.mrf.mxu0
        %1225 = vdwg.mxu0
        %1226 = vrot.lane.b32.xlu0 %v962, 64
        %v1227 = vpop.permute.xlu0 %1226
        %v1230 = vsel %vm1127, %v1149, 0
        %1232 = vmatprep.subr.mxu0 0.0
        %1233 = vmatpush1.msra.mxu0 0.0
        %1234 = vmatprep.subr.mxu0 0.0
        %1235 = vmatpush1.msra.mxu0 0.0
        %1236 = vmatprep.subr.mxu0 0.0
        %1237 = vmatpush1.msra.mxu0 0.0
        %1238 = vmatprep.subr.mxu0 0.0
        %1239 = vmatpush1.msra.mxu0 0.0
        %1240 = vmatprep.subr.mxu0 0.0
        %1241 = vmatpush1.msra.mxu0 0.0
        %1242 = vmatprep.subr.mxu0 0.0
        %1243 = vmatpush1.msra.mxu0 0.0
        %1244 = vmatprep.subr.mxu0 0.0
        %1245 = vmatpush1.msra.mxu0 0.0
        %1246 = vmatprep.subr.mxu0 0.0
        %1247 = vmatpush1.msra.mxu0 0.0
        %1248 = vmatprep.subr.mxu0 0.0
        %1249 = vmatpush1.msra.mxu0 0.0
        %1250 = vmatprep.subr.mxu0 0.0
        %1251 = vmatpush1.msra.mxu0 0.0
        %1252 = vmatprep.subr.mxu0 0.0
        %1253 = vmatpush1.msra.mxu0 0.0
        %1254 = vmatprep.subr.mxu0 0.0
        %1255 = vmatpush1.msra.mxu0 0.0
        %1256 = vmatprep.subr.mxu0 0.0
        %1257 = vmatpush1.msra.mxu0 0.0
        %1258 = vmatprep.subr.mxu0 0.0
        %1259 = vmatpush1.msra.mxu0 0.0
        %1260 = vmatprep.subr.mxu0 0.0
        %1261 = vmatpush1.msra.mxu0 0.0
        %1262 = vmatprep.subr.mxu0 0.0
        %1263 = vmatpush1.msra.mxu0 %v1227
        %1264 = vmatprep.subr.mxu0 0.0
        %1265 = vmatpush2.msra.mxu0 0.0
        %1266 = vmatprep.subr.mxu0 0.0
        %1267 = vmatpush2.msra.mxu0 0.0
        %1268 = vmatprep.subr.mxu0 0.0
        %1269 = vmatpush2.msra.mxu0 0.0
        %1270 = vmatprep.subr.mxu0 0.0
        %1271 = vmatpush2.msra.mxu0 0.0
        %1272 = vmatprep.subr.mxu0 0.0
        %1273 = vmatpush2.msra.mxu0 0.0
        %1274 = vmatprep.subr.mxu0 0.0
        %1275 = vmatpush2.msra.mxu0 0.0
        %1276 = vmatprep.subr.mxu0 0.0
        %1277 = vmatpush2.msra.mxu0 0.0
        %1278 = vmatprep.subr.mxu0 0.0
        %1279 = vmatpush2.msra.mxu0 0.0
        %1280 = vmatprep.subr.mxu0 0.0
        %1281 = vmatpush2.msra.mxu0 0.0
        %1282 = vmatprep.subr.mxu0 0.0
        %1283 = vmatpush2.msra.mxu0 0.0
        %1284 = vmatprep.subr.mxu0 0.0
        %1285 = vmatpush2.msra.mxu0 0.0
        %1286 = vmatprep.subr.mxu0 0.0
        %1287 = vmatpush2.msra.mxu0 0.0
        %1288 = vmatprep.subr.mxu0 0.0
        %1289 = vmatpush2.msra.mxu0 0.0
        %1290 = vmatprep.subr.mxu0 0.0
        %1291 = vmatpush2.msra.mxu0 0.0
        %1292 = vmatprep.subr.mxu0 0.0
        %1293 = vmatpush2.msra.mxu0 0.0
        %1294 = vmatprep.subr.mxu0 0.0
        %1295 = vmatpush2.msra.mxu0 0.0
        %1296 = vmatprep.mubr.f32.mxu0 0.0
        %1297 = vmatmul.mubr.f32.gmra.mxu0 %v1230
        %v1298 = vpop.f32.mrf.mxu0
        %v1299 = vadd.f32 0.0, %v1298
        %v1300 = vpop.f32.mrf.mxu0
        %1301 = vdwg.mxu0
        %1303 = vrot.lane.b32.xlu0 %v1299, 16
        %v1304 = vpop.permute.xlu0 %1303
        %v1306 = vsel %vm965, %v1223, %v1304
        %v1307 = vpack.c.bf16 %v1306, %v1306
        %v1308 = vld [vmem:[%s817] sm:$0xf]
        %v1309 = vld [vmem:[%s817 + $0x4] sm:$0xf]
        %v1310 = vld [vmem:[%s817 + $0x8] sm:$0xf]
        %v1311 = vld [vmem:[%s817 + $0xc] sm:$0xf]
        %v1312 = vld [vmem:[%s820] sm:$0x1]
        %v1313 = vunpack.c.l.bf16 %v1312
        %v1314 = vlaneseq
        %v1315 = vshrl.u32 %v1314, 7
        %v1316 = vsub.s32 0, %v1315
        %v1317 = vrot.slane %v1313, %v1316
        %v1322 = vunpack.c.l.b16 %v1308
        %v1323 = vunpack.c.l.b16 %v1309
        %v1324 = vunpack.c.l.b16 %v1310
        %v1325 = vunpack.c.l.b16 %v1311
        %v1326 = vpack.c.b16 %v1323, %v1322
        %v1327 = vpack.c.b16 %v1325, %v1324
        %v1331 = vsel %vm916, %v1307, 0
        %1333 = vmatprep.subr.bf16.mxu0 0
        %1334 = vmatpush1.bf16.msra.mxu0 0
        %1335 = vmatprep.subr.bf16.mxu0 0
        %1336 = vmatpush1.bf16.msra.mxu0 0
        %1337 = vmatprep.subr.bf16.mxu0 0
        %1338 = vmatpush1.bf16.msra.mxu0 0
        %1339 = vmatprep.subr.bf16.mxu0 0
        %1340 = vmatpush1.bf16.msra.mxu0 0
        %1341 = vmatprep.subr.bf16.mxu0 0
        %1342 = vmatpush1.bf16.msra.mxu0 0
        %1343 = vmatprep.subr.bf16.mxu0 0
        %1344 = vmatpush1.bf16.msra.mxu0 0
        %1345 = vmatprep.subr.bf16.mxu0 0
        %1346 = vmatpush1.bf16.msra.mxu0 %v1327
        %1347 = vmatprep.subr.bf16.mxu0 0
        %1348 = vmatpush1.bf16.msra.mxu0 %v1326
        %1349 = vmatprep.subr.bf16.mxu0 0
        %1350 = vmatpush2.bf16.msra.mxu0 0
        %1351 = vmatprep.subr.bf16.mxu0 0
        %1352 = vmatpush2.bf16.msra.mxu0 0
        %1353 = vmatprep.subr.bf16.mxu0 0
        %1354 = vmatpush2.bf16.msra.mxu0 0
        %1355 = vmatprep.subr.bf16.mxu0 0
        %1356 = vmatpush2.bf16.msra.mxu0 0
        %1357 = vmatprep.subr.bf16.mxu0 0
        %1358 = vmatpush2.bf16.msra.mxu0 0
        %1359 = vmatprep.subr.bf16.mxu0 0
        %1360 = vmatpush2.bf16.msra.mxu0 0
        %1361 = vmatprep.subr.bf16.mxu0 0
        %1362 = vmatpush2.bf16.msra.mxu0 0
        %1363 = vmatprep.subr.bf16.mxu0 0
        %1364 = vmatpush2.bf16.msra.mxu0 0
        %1365 = vmatprep.mubr.bf16.mxu0 0
        %1366 = vmatmul.mubr.bf16.gmra.mxu0 %v1331
        %v1367 = vpop.f32.mrf.mxu0
        %v1368 = vadd.f32 %v1317, %v1367
        %v1369 = vpop.f32.mrf.mxu0
        %v1370 = vpop.f32.mrf.mxu0
        %v1371 = vpop.f32.mrf.mxu0
        %1372 = vdwg.mxu0
        %v1373 = vadd.f32 %v1368, %v892
        %v1374 = vld [vmem:[%s823] sm:$0x1]
        %v1375 = vunpack.c.l.bf16 %v1374
        %v1376 = vld [vmem:[%s826] sm:$0x1]
        %v1377 = vunpack.c.l.bf16 %v1376
        %v1378 = vsel %vm916, %v1373, 0.0
        %1379 = vadd.xlane.f32.xlu0 %v1378
        %v1380 = vpop.xlane.xlu0 %1379
        %v1381 = vrcp.pop 32.0
        %v1382 = vmul.f32 %v1380, %v1381
        %v1383 = vsub.f32 %v1373, %v1382
        %v1384 = vmul.f32 %v1383, %v1383
        %v1385 = vsel %vm916, %v1384, 0.0
        %1386 = vadd.xlane.f32.xlu0 %v1385
        %v1387 = vpop.xlane.xlu0 %1386
        %v1388 = vmul.f32 %v1387, %v1381
        %v1389 = vadd.f32 %v1388, 1e-12
        %v1390 = vrsqrt.pop %v1389
        %v1391 = vmul.f32 %v1383, %v1390
        %v1392 = vlaneseq
        %v1393 = vshrl.u32 %v1392, 7
        %v1394 = vsub.s32 0, %v1393
        %v1395 = vrot.slane %v1375, %v1394
        %v1396 = vmul.f32 %v1391, %v1395
        %v1397 = vlaneseq
        %v1398 = vshrl.u32 %v1397, 7
        %v1399 = vsub.s32 0, %v1398
        %v1400 = vrot.slane %v1377, %v1399
        %v1401 = vadd.f32 %v1396, %v1400
        %v1402 = vpack.c.bf16 %v1401, %v1401
        %v1403 = vld [vmem:[%s831] sm:$0xf]
        %v1404 = vld [vmem:[%s831 + $0x4] sm:$0xf]
        %v1405 = vld [vmem:[%s831 + $0x8] sm:$0xf]
        %v1406 = vld [vmem:[%s831 + $0xc] sm:$0xf]
        %v1407 = vld [vmem:[%s834] sm:$0x1]
        %v1408 = vunpack.c.l.bf16 %v1407
        %v1409 = vlaneseq
        %v1410 = vshrl.u32 %v1409, 7
        %v1411 = vsub.s32 0, %v1410
        %v1412 = vrot.slane %v1408, %v1411
        %v1417 = vunpack.c.l.b16 %v1403
        %v1418 = vunpack.c.l.b16 %v1404
        %v1419 = vunpack.c.l.b16 %v1405
        %v1420 = vunpack.c.l.b16 %v1406
        %v1421 = vpack.c.b16 %v1418, %v1417
        %v1422 = vpack.c.b16 %v1420, %v1419
        %v1426 = vsel %vm916, %v1402, 0
        %1428 = vmatprep.subr.bf16.mxu0 0
        %1429 = vmatpush1.bf16.msra.mxu0 0
        %1430 = vmatprep.subr.bf16.mxu0 0
        %1431 = vmatpush1.bf16.msra.mxu0 0
        %1432 = vmatprep.subr.bf16.mxu0 0
        %1433 = vmatpush1.bf16.msra.mxu0 0
        %1434 = vmatprep.subr.bf16.mxu0 0
        %1435 = vmatpush1.bf16.msra.mxu0 0
        %1436 = vmatprep.subr.bf16.mxu0 0
        %1437 = vmatpush1.bf16.msra.mxu0 0
        %1438 = vmatprep.subr.bf16.mxu0 0
        %1439 = vmatpush1.bf16.msra.mxu0 0
        %1440 = vmatprep.subr.bf16.mxu0 0
        %1441 = vmatpush1.bf16.msra.mxu0 %v1422
        %1442 = vmatprep.subr.bf16.mxu0 0
        %1443 = vmatpush1.bf16.msra.mxu0 %v1421
        %1444 = vmatprep.subr.bf16.mxu0 0
        %1445 = vmatpush2.bf16.msra.mxu0 0
        %1446 = vmatprep.subr.bf16.mxu0 0
        %1447 = vmatpush2.bf16.msra.mxu0 0
        %1448 = vmatprep.subr.bf16.mxu0 0
        %1449 = vmatpush2.bf16.msra.mxu0 0
        %1450 = vmatprep.subr.bf16.mxu0 0
        %1451 = vmatpush2.bf16.msra.mxu0 0
        %1452 = vmatprep.subr.bf16.mxu0 0
        %1453 = vmatpush2.bf16.msra.mxu0 0
        %1454 = vmatprep.subr.bf16.mxu0 0
        %1455 = vmatpush2.bf16.msra.mxu0 0
        %1456 = vmatprep.subr.bf16.mxu0 0
        %1457 = vmatpush2.bf16.msra.mxu0 0
        %1458 = vmatprep.subr.bf16.mxu0 0
        %1459 = vmatpush2.bf16.msra.mxu0 0
        %1460 = vmatprep.mubr.bf16.mxu0 0
        %1461 = vmatmul.mubr.bf16.gmra.mxu0 %v1426
        %v1462 = vpop.f32.mrf.mxu0
        %v1463 = vadd.f32 %v1412, %v1462
        %v1464 = vpop.f32.mrf.mxu0
        %v1465 = vpop.f32.mrf.mxu0
        %v1466 = vpop.f32.mrf.mxu0
        %1467 = vdwg.mxu0
        %v1468 = vmul.f32 %v1463, 0.5
        %v1469 = vmul.f32 %v1463, 0.044715
        %v1470 = vmul.f32 %v1469, %v1463
        %v1471 = vmul.f32 %v1470, %v1463
        %v1472 = vadd.f32 %v1463, %v1471
        %v1473 = vmul.f32 %v1472, 0.7978846
        %v1474 = vtanh.pop %v1473
        %v1475 = vadd.f32 %v1474, 1.0
        %v1476 = vmul.f32 %v1468, %v1475
        %v1477 = vpack.c.bf16 %v1476, %v1476
        %v1478 = vld [vmem:[%s839] sm:$0xf]
        %v1479 = vld [vmem:[%s839 + $0x4] sm:$0xf]
        %v1480 = vld [vmem:[%s839 + $0x8] sm:$0xf]
        %v1481 = vld [vmem:[%s839 + $0xc] sm:$0xf]
        %v1482 = vld [vmem:[%s839 + $0x10] sm:$0xf]
        %v1483 = vld [vmem:[%s839 + $0x14] sm:$0xf]
        %v1484 = vld [vmem:[%s839 + $0x18] sm:$0xf]
        %v1485 = vld [vmem:[%s839 + $0x1c] sm:$0xf]
        %v1486 = vld [vmem:[%s842] sm:$0x1]
        %v1487 = vunpack.c.l.bf16 %v1486
        %v1488 = vlaneseq
        %v1489 = vshrl.u32 %v1488, 7
        %v1490 = vsub.s32 0, %v1489
        %v1491 = vrot.slane %v1487, %v1490
        %v1500 = vunpack.c.l.b16 %v1478
        %v1501 = vunpack.c.l.b16 %v1479
        %v1502 = vunpack.c.l.b16 %v1480
        %v1503 = vunpack.c.l.b16 %v1481
        %v1504 = vunpack.c.l.b16 %v1482
        %v1505 = vunpack.c.l.b16 %v1483
        %v1506 = vunpack.c.l.b16 %v1484
        %v1507 = vunpack.c.l.b16 %v1485
        %v1508 = vpack.c.b16 %v1501, %v1500
        %v1509 = vpack.c.b16 %v1503, %v1502
        %v1510 = vpack.c.b16 %v1505, %v1504
        %v1511 = vpack.c.b16 %v1507, %v1506
        %vm1516 = vcmask 523264
        %v1518 = vsel %vm1516, %v1477, 0
        %1520 = vmatprep.subr.bf16.mxu0 0
        %1521 = vmatpush1.bf16.msra.mxu0 0
        %1522 = vmatprep.subr.bf16.mxu0 0
        %1523 = vmatpush1.bf16.msra.mxu0 0
        %1524 = vmatprep.subr.bf16.mxu0 0
        %1525 = vmatpush1.bf16.msra.mxu0 0
        %1526 = vmatprep.subr.bf16.mxu0 0
        %1527 = vmatpush1.bf16.msra.mxu0 0
        %1528 = vmatprep.subr.bf16.mxu0 0
        %1529 = vmatpush1.bf16.msra.mxu0 %v1511
        %1530 = vmatprep.subr.bf16.mxu0 0
        %1531 = vmatpush1.bf16.msra.mxu0 %v1510
        %1532 = vmatprep.subr.bf16.mxu0 0
        %1533 = vmatpush1.bf16.msra.mxu0 %v1509
        %1534 = vmatprep.subr.bf16.mxu0 0
        %1535 = vmatpush1.bf16.msra.mxu0 %v1508
        %1536 = vmatprep.subr.bf16.mxu0 0
        %1537 = vmatpush2.bf16.msra.mxu0 0
        %1538 = vmatprep.subr.bf16.mxu0 0
        %1539 = vmatpush2.bf16.msra.mxu0 0
        %1540 = vmatprep.subr.bf16.mxu0 0
        %1541 = vmatpush2.bf16.msra.mxu0 0
        %1542 = vmatprep.subr.bf16.mxu0 0
        %1543 = vmatpush2.bf16.msra.mxu0 0
        %1544 = vmatprep.subr.bf16.mxu0 0
        %1545 = vmatpush2.bf16.msra.mxu0 0
        %1546 = vmatprep.subr.bf16.mxu0 0
        %1547 = vmatpush2.bf16.msra.mxu0 0
        %1548 = vmatprep.subr.bf16.mxu0 0
        %1549 = vmatpush2.bf16.msra.mxu0 0
        %1550 = vmatprep.subr.bf16.mxu0 0
        %1551 = vmatpush2.bf16.msra.mxu0 0
        %1552 = vmatprep.mubr.bf16.mxu0 0
        %1553 = vmatmul.mubr.bf16.gmra.mxu0 %v1518
        %v1554 = vpop.f32.mrf.mxu0
        %v1555 = vadd.f32 %v1491, %v1554
        %v1556 = vpop.f32.mrf.mxu0
        %v1557 = vpop.f32.mrf.mxu0
        %v1558 = vpop.f32.mrf.mxu0
        %1559 = vdwg.mxu0
        %v1560 = vadd.f32 %v1555, %v1401
        %v1561 = vld [vmem:[%s845] sm:$0x1]
        %v1562 = vunpack.c.l.bf16 %v1561
        %v1563 = vld [vmem:[%s848] sm:$0x1]
        %v1564 = vunpack.c.l.bf16 %v1563
        %v1565 = vsel %vm916, %v1560, 0.0
        %1566 = vadd.xlane.f32.xlu0 %v1565
        %v1567 = vpop.xlane.xlu0 %1566
        %v1568 = vmul.f32 %v1567, %v1381
        %v1569 = vsub.f32 %v1560, %v1568
        %v1570 = vmul.f32 %v1569, %v1569
        %v1571 = vsel %vm916, %v1570, 0.0
        %1572 = vadd.xlane.f32.xlu0 %v1571
        %v1573 = vpop.xlane.xlu0 %1572
        %v1574 = vmul.f32 %v1573, %v1381
        %v1575 = vadd.f32 %v1574, 1e-12
        %v1576 = vrsqrt.pop %v1575
        %v1577 = vmul.f32 %v1569, %v1576
        %v1578 = vlaneseq
        %v1579 = vshrl.u32 %v1578, 7
        %v1580 = vsub.s32 0, %v1579
        %v1581 = vrot.slane %v1562, %v1580
        %v1582 = vmul.f32 %v1577, %v1581
        %v1583 = vlaneseq
        %v1584 = vshrl.u32 %v1583, 7
        %v1585 = vsub.s32 0, %v1584
        %v1586 = vrot.slane %v1564, %v1585
        %v1587 = vadd.f32 %v1582, %v1586
        %1588 = vst.msk [vmem:[#allocation2] sm:$0xff] %vm916, %v1587
        %p1589 = scmp.eq.s32.totalorder %s39, 1
        // Predicated region
        $region109: #{tpu_custom_call.1} parent=91 // pred_check
          %p1590 = pneg %p1589
        $region110: #{tpu_custom_call.1} parent=91 // pred_check_branch
          %1592 = sbr.rel (%p1590) target = $region112
        $region111: #{tpu_custom_call.1} parent=91 // pred_region
          %v1593 = vpack.c.bf16 %v1587, %v1587
          %vm1594 = vcmask 257024
          %1595 = vst.msk [vmem:[%s796] sm:$0xf] %vm1594, %v1593
        $region112: #{tpu_custom_call.1} parent=91 // pred_fallthru
          _
        %s1596 = sand.u32 %s507, 1
        %s1597 = scalar_lea.sflag [#allocation5], %s1596
        %s1598 = sand.u32 %s507, 1
        %s1599 = smul.addr %s1598, 4
        %s1600 = scalar_lea.vmem [#allocation9], %s1599
        // Predicated region
        $region113: #{tpu_custom_call.1} parent=91 // pred_check
          %p1601 = pneg %p517
        $region114: #{tpu_custom_call.1} parent=91 // pred_check_branch
          %1603 = sbr.rel (%p1601) target = $region116
        $region115: #{tpu_custom_call.1} parent=91 // pred_region
          %s1605 = ssub.s32 64, 64
          %1606 = vsyncadd %s1597, %s1605
          %s1607 = smul.addr %s38, 64
          %s1608 = scalar_lea.hbm %s18, %s1607
          %s1610 = sshll.u32 %s1600, 4
          %s1611 = int_to_ptr.vmem [resolvable:$true] %s1610
          %1613 = dma.vmem_to_hbm [thread:$0]  %s1611, 64, %s1608, %s1597
        $region116: #{tpu_custom_call.1} parent=91 // pred_fallthru
          _
      $region92: #{tpu_custom_call.1} parent=5 // pred_fallthru
        _
      %p1614 = scmp.le.s32.totalorder 2, %s29
      // Predicated region
      $region117: #{tpu_custom_call.1} parent=5 // pred_check
        %p1615 = pneg %p1614
      $region118: #{tpu_custom_call.1} parent=5 // pred_check_branch
        %1617 = sbr.rel (%p1615) target = $region120
      $region119: #{tpu_custom_call.1} parent=5 // pred_region
        %s1618 = ssub.s32 %s29, 2
        // Predicated region
        $region121: #{tpu_custom_call.1} parent=119 // pred_check
          %p1619 = pneg %p523
        $region122: #{tpu_custom_call.1} parent=119 // pred_check_branch
          %1621 = sbr.rel (%p1619) target = $region124
        $region123: #{tpu_custom_call.1} parent=119 // pred_region
          %s1622 = sand.u32 %s508, 1
          %s1623 = scalar_lea.sflag [#allocation5], %s1622
          %s1624 = sand.u32 %s508, 1
          %s1625 = smul.addr %s1624, 4
          %s1626 = scalar_lea.vmem [#allocation9], %s1625
          %1627 = dma.done %s1623, 64
        $region124: #{tpu_custom_call.1} parent=119 // pred_fallthru
          _
      $region120: #{tpu_custom_call.1} parent=5 // pred_fallthru
        _
    $region6: #{tpu_custom_call.1} parent=1 // loop_footer
      %s33 = sadd.s32 1, %s29
    $region7: #{tpu_custom_call.1} parent=1 // loop_footer_branch
      %28 = sbr.rel target = $region3
    $region8: #{tpu_custom_call.1} parent=1 // loop_exit
      _
    %1628 = vsyncpa [#allocation4], 1
    %s1629 = scalar_lea.sflag [#allocation4], 1
    %1630 = vsyncpa %s1629, 1
    %1631 = vsyncpa [#allocation7], 1
    %1632 = vsyncpa [#allocation5], 1
    %s1633 = scalar_lea.sflag [#allocation5], 1
    %1634 = vsyncpa %s1633, 1

</llo_original>
